<compile_context>
chip_gen: v7x
topology: tpu7x:2x2x1
jax: 0.10.0
libtpu: 0.0.40
codegen_flags: <defaults>
</compile_context>

<pallas_src>
import functools

import jax
import jax.numpy as jnp
from jax import lax
from jax.experimental import pallas as pl
from jax.experimental.pallas import tpu as pltpu


def _attn3d_kernel(x_hbm, gmat_ref, gamma_ref, beta_ref,
                   wqkv_ref, bqkv_ref, wp_ref, bp_ref,
                   o_ref,
                   xn_scr, q_scr, k_scr, v_scr, dma_sem,
                   *, eps, n_valid):
    b = pl.program_id(0)
    qt = pl.program_id(1)
    C = gmat_ref.shape[0]
    NP = xn_scr.shape[1]          # padded token count (multiple of 128)
    TQ = o_ref.shape[-1]
    cdt = k_scr.dtype             # MXU operand dtype (f32 or bf16)

    # ---- once per batch element: DMA x, GroupNorm, fused QKV projection ----
    @pl.when(qt == 0)
    def _():
        # raw x[b] (f32) lands directly in xn_scr and is normalized in place:
        # no resident / double-buffered x slab in VMEM.
        cp = pltpu.make_async_copy(x_hbm.at[b], xn_scr, dma_sem)
        cp.start()
        cp.wait()
        x = xn_scr[...]                                          # (C, NP) f32

        # centered two-pass group statistics (gmat = group pooling / (N*cg), host-built)
        sum_c = jnp.sum(x, axis=1, keepdims=True)                # (C, 1)
        mean_c = jnp.dot(gmat_ref[...], sum_c,
                         preferred_element_type=jnp.float32)     # (C, 1) per-group mean
        xc = x - mean_c
        if n_valid < NP:                                         # zero out padded tokens
            col = lax.broadcasted_iota(jnp.int32, (C, NP), 1)
            xc = jnp.where(col < n_valid, xc, 0.0)
        ssq_c = jnp.sum(xc * xc, axis=1, keepdims=True)
        var_c = jnp.dot(gmat_ref[...], ssq_c,
                        preferred_element_type=jnp.float32)      # (C, 1) per-group var
        xn = xc * lax.rsqrt(var_c + eps) * gamma_ref[...] + beta_ref[...]
        xn_scr[...] = xn

        # fused QKV: one (3C, C) @ (C, NP) matmul; q rows pre-scaled by C**-0.5 on host.
        # q/k/v all stay channel-major (C, NP): no prologue transposes.
        qkv = jnp.dot(wqkv_ref[...], xn.astype(cdt),
                      preferred_element_type=jnp.float32) + bqkv_ref[...]   # (3C, NP) f32
        q_scr[...] = qkv[:C, :].astype(cdt)
        k_scr[...] = qkv[C:2 * C, :].astype(cdt)
        v_scr[...] = qkv[2 * C:, :].astype(cdt)

    # ---- one TQ-wide query tile of attention ----
    q0 = pl.multiple_of(qt * TQ, TQ)
    q_tile = q_scr[:, pl.ds(q0, TQ)]                             # (C, TQ)

    # scores[i, j] = sum_c q[c, i] * k[c, j]
    scores = lax.dot_general(q_tile, k_scr[...],
                             (((0,), (0,)), ((), ())),
                             preferred_element_type=jnp.float32)  # (TQ, NP) f32
    if n_valid < NP:                                              # mask padded keys
        key = lax.broadcasted_iota(jnp.int32, (TQ, NP), 1)
        scores = jnp.where(key < n_valid, scores, jnp.float32(-1e30))

    m = jnp.max(scores, axis=-1, keepdims=True)                   # (TQ, 1)
    p = jnp.exp(scores - m).astype(cdt)                           # (TQ, NP)

    # Deferred softmax normalization: P@V first, scale only the (C, TQ) result.
    # l is produced lane-oriented as (1, TQ) via a ones-row matmul so the per-column
    # scaling needs no sublane->lane relayout.
    ones_row = jnp.ones((1, NP), dtype=cdt)
    l_row = lax.dot_general(ones_row, p, (((1,), (1,)), ((), ())),
                            preferred_element_type=jnp.float32)   # (1, TQ)
    pv = lax.dot_general(v_scr[...], p, (((1,), (1,)), ((), ())),
                         preferred_element_type=jnp.float32)      # (C, TQ)
    pv = pv * (1.0 / l_row)

    proj = jnp.dot(wp_ref[...], pv.astype(cdt),
                   preferred_element_type=jnp.float32) + bp_ref[...]        # (C, TQ)

    # residual adds the *normalized* activations (the PyTorch forward reassigns
    # x = norm(x) before the residual add)
    o_ref[...] = (xn_scr[:, pl.ds(q0, TQ)] + proj).astype(o_ref.dtype)


def _vmem_capacity_bytes():
    try:
        cap = getattr(pltpu.get_tpu_info(), "vmem_capacity_bytes", None)
        if cap:
            return int(cap)
    except Exception:
        pass
    return 128 * 1024 * 1024      # v5e/v6e default; v7x reports 64 MiB via get_tpu_info


def attention3d_forward(x_ncdhw, params, *, compute_dtype=None, tq=None):
    """x_ncdhw: (B, C, D, H, W) float32.  params: dict of Attention3D weights."""
    B, C, D, H, W = x_ncdhw.shape
    N = D * H * W
    G = C // 4 if C <= 32 else 32
    cg = C // G

    if compute_dtype is None:
        # bf16 MXU operands (f32 accumulation / softmax / GroupNorm) on real TPUs;
        # exact f32 everywhere else (CPU DotThunk cannot do bf16 x bf16 -> f32).
        compute_dtype = jnp.bfloat16 if jax.default_backend() == "tpu" else jnp.float32
    compute_dtype = jnp.dtype(compute_dtype)
    it = compute_dtype.itemsize

    # pad the token axis to a multiple of 128 (lane-dense, unmasked stores)
    NP = ((N + 127) // 128) * 128

    # ---- generation-aware, itemized VMEM budgeting ----
    vmem_budget = int(0.85 * _vmem_capacity_bytes())
    fixed = C * NP * 4 + 3 * C * NP * it                     # xn + q/k/v scratch
    consts = 2 * (C * C * 4 + 2 * C * 4 + 3 * C * C * it     # double-buffered const inputs
                  + 3 * C * 4 + C * C * it + C * 4)
    prologue = 3 * C * NP * 4                                # (3C, NP) f32 qkv intermediate

    def tile_bytes(t):
        return (3 * t * NP * 4 + t * NP * it                 # scores / exp / p(cdt)
                + 4 * C * t * 4                              # pv / proj temporaries
                + 2 * C * t * 4)                             # output tile double buffer

    if tq is None:
        TQ = 128
        for cand in (512, 256):
            if NP % cand == 0 and (fixed + consts + prologue
                                   + tile_bytes(cand) + (4 << 20)) <= vmem_budget:
                TQ = cand
                break
    else:
        TQ = int(tq)
    assert NP % TQ == 0 and TQ % 128 == 0, (NP, TQ)
    NQ = NP // TQ

    vmem_est = fixed + consts + prologue + tile_bytes(TQ)
    vmem_limit = int(min(max(vmem_est + (8 << 20), 24 << 20), vmem_budget))

    # natural (B, C, N) slab (free reshape), zero-padded on the token axis if needed
    x_bcn = x_ncdhw.reshape(B, C, N).astype(jnp.float32)
    if NP != N:
        x_bcn = jnp.pad(x_bcn, ((0, 0), (0, 0), (0, NP - N)))

    scale = float(C) ** (-0.5)
    wqkv = jnp.concatenate([params["wq"] * scale, params["wk"], params["wv"]],
                           axis=0).astype(compute_dtype)              # (3C, C)
    bqkv = jnp.concatenate([params["bq"] * scale, params["bk"], params["bv"]],
                           axis=0).reshape(3 * C, 1).astype(jnp.float32)
    wp = params["wp"].astype(compute_dtype)
    bp = params["bp"].reshape(C, 1).astype(jnp.float32)
    gamma = params["gamma"].reshape(C, 1).astype(jnp.float32)
    beta = params["beta"].reshape(C, 1).astype(jnp.float32)
    ch = jnp.arange(C, dtype=jnp.int32)
    gmat = ((ch[:, None] // cg) == (ch[None, :] // cg)
            ).astype(jnp.float32) / float(N * cg)                     # (C, C) group pooling

    kernel = functools.partial(_attn3d_kernel, eps=1e-6, n_valid=N)

    flops = B * (8 * N * C * C + 4 * N * N * C)
    cost = pl.CostEstimate(flops=int(flops), transcendentals=int(B * N * N),
                           bytes_accessed=int(8 * B * C * N + 4 * (5 * C * C + 8 * C)))

    def const_spec(shape):
        return pl.BlockSpec(shape, lambda bi, ti: (0,) * len(shape))

    out_bcn = pl.pallas_call(
        kernel,
        out_shape=jax.ShapeDtypeStruct((B, C, NP), jnp.float32),
        grid=(B, NQ),
        in_specs=[
            pl.BlockSpec(memory_space=pl.ANY),   # x stays in HBM; DMA'd once per batch elem
            const_spec((C, C)),                  # gmat
            const_spec((C, 1)),                  # gamma
            const_spec((C, 1)),                  # beta
            const_spec((3 * C, C)),              # wqkv
            const_spec((3 * C, 1)),              # bqkv
            const_spec((C, C)),                  # wp
            const_spec((C, 1)),                  # bp
        ],
        out_specs=pl.BlockSpec((None, C, TQ), lambda bi, ti: (bi, 0, ti)),
        scratch_shapes=[
            pltpu.VMEM((C, NP), jnp.float32),    # xn (raw x lands here, normalized in place)
            pltpu.VMEM((C, NP), compute_dtype),  # q
            pltpu.VMEM((C, NP), compute_dtype),  # k
            pltpu.VMEM((C, NP), compute_dtype),  # v
            pltpu.SemaphoreType.DMA,             # x DMA completion
        ],
        compiler_params=pltpu.CompilerParams(
            # query-tile axis must stay "arbitrary": it reuses per-batch scratch sequentially
            dimension_semantics=("parallel", "arbitrary"),
            vmem_limit_bytes=vmem_limit,
        ),
        cost_estimate=cost,
    )(x_bcn, gmat, gamma, beta, wqkv, bqkv, wp, bp)

    out = out_bcn[:, :, :N] if NP != N else out_bcn
    return out.reshape(B, C, D, H, W)


def attention3d_reference(x, params):
    """Pure-JAX reference mirroring the PyTorch forward in NCDHW."""
    B, C, D, H, W = x.shape
    G = C // 4 if C <= 32 else 32
    xg = x.reshape(B, G, C // G, D, H, W)
    mean = jnp.mean(xg, axis=(2, 3, 4, 5), keepdims=True)
    var = jnp.var(xg, axis=(2, 3, 4, 5), keepdims=True)
    xn = ((xg - mean) / jnp.sqrt(var + 1e-6)).reshape(B, C, D, H, W)
    xn = xn * params["gamma"].reshape(1, C, 1, 1, 1) + params["beta"].reshape(1, C, 1, 1, 1)

    def conv1(t, w, b):
        return jnp.einsum("bcdhw,oc->bodhw", t, w) + b.reshape(1, C, 1, 1, 1)

    q = conv1(xn, params["wq"], params["bq"]).reshape(B, C, -1)
    k = conv1(xn, params["wk"], params["bk"]).reshape(B, C, -1)
    v = conv1(xn, params["wv"], params["bv"]).reshape(B, C, -1)
    attn_wts = jnp.einsum("bci,bcj->bij", q, k)
    s = jax.nn.softmax(attn_wts * float(C) ** (-0.5), axis=2)
    attention = jnp.einsum("bcj,bij->bci", v, s).reshape(B, C, D, H, W)
    attention = conv1(attention, params["wp"], params["bp"])
    return xn + attention


def _make_params(key, C):
    keys = jax.random.split(key, 10)
    return {
        "gamma": 1.0 + 0.1 * jax.random.normal(keys[0], (C,), dtype=jnp.float32),
        "beta": 0.05 * jax.random.normal(keys[1], (C,), dtype=jnp.float32),
        "wq": 0.2 * jax.random.normal(keys[2], (C, C), dtype=jnp.float32),
        "bq": 0.05 * jax.random.normal(keys[3], (C,), dtype=jnp.float32),
        "wk": 0.2 * jax.random.normal(keys[4], (C, C), dtype=jnp.float32),
        "bk": 0.05 * jax.random.normal(keys[5], (C,), dtype=jnp.float32),
        "wv": 0.2 * jax.random.normal(keys[6], (C, C), dtype=jnp.float32),
        "bv": 0.05 * jax.random.normal(keys[7], (C,), dtype=jnp.float32),
        "wp": 0.2 * jax.random.normal(keys[8], (C, C), dtype=jnp.float32),
        "bp": 0.05 * jax.random.normal(keys[9], (C,), dtype=jnp.float32),
    }


if __name__ == "__main__":
    def run_case(key, B, C, D, H, W, compute_dtype, tol):
        kx, kp = jax.random.split(key)
        x = jax.random.normal(kx, (B, C, D, H, W), dtype=jnp.float32)
        params = _make_params(kp, C)
        out = attention3d_forward(x, params, compute_dtype=compute_dtype)
        out = jax.block_until_ready(out)
        ref = attention3d_reference(x, params)
        assert out.shape == (B, C, D, H, W)
        err = float(jnp.max(jnp.abs(out - ref)))
        assert jnp.allclose(out, ref, atol=tol, rtol=tol), (
            f"Pallas kernel mismatch vs reference (max abs err {err})")

    key = jax.random.PRNGKey(0)
    k1, k2, k3 = jax.random.split(key, 3)

    # 1) N=64 -> padded to 128 tokens (exercises key masking), exact f32 path
    run_case(k1, 2, 16, 4, 4, 4, jnp.float32, 1e-4)
    # 2) N=1024 -> two 512-wide query tiles (exercises tiling + per-batch scratch reuse), f32
    run_case(k2, 1, 8, 16, 8, 8, jnp.float32, 1e-4)
    # 3) auto dtype: bf16 MXU operands on a real TPU backend, f32 elsewhere; loose
    #    tolerance because bf16 operand rounding (~1e-2 abs) dominates on the TPU path.
    run_case(k3, 2, 16, 4, 4, 4, None, 1e-1)

    print("KERNEL_OK")
</pallas_src>

<mosaic_0001>
module attributes {stable_mosaic.version = 11 : i64} {
  func.func @_attn3d_kernel(%arg0: i32, %arg1: i32, %arg2: memref<2x16x128xf32, #tpu.memory_space<any>>, %arg3: memref<16x16xf32, #tpu.memory_space<vmem>>, %arg4: memref<16x1xf32, #tpu.memory_space<vmem>>, %arg5: memref<16x1xf32, #tpu.memory_space<vmem>>, %arg6: memref<48x16xf32, #tpu.memory_space<vmem>>, %arg7: memref<48x1xf32, #tpu.memory_space<vmem>>, %arg8: memref<16x16xf32, #tpu.memory_space<vmem>>, %arg9: memref<16x1xf32, #tpu.memory_space<vmem>>, %arg10: memref<1x16x128xf32, #tpu.memory_space<vmem>>, %arg11: memref<16x128xf32, #tpu.memory_space<vmem>>, %arg12: memref<16x128xf32, #tpu.memory_space<vmem>>, %arg13: memref<16x128xf32, #tpu.memory_space<vmem>>, %arg14: memref<16x128xf32, #tpu.memory_space<vmem>>, %arg15: memref<!tpu.dma_semaphore, #tpu.memory_space<semaphore_mem>>) attributes {dimension_semantics = [#tpu.dimension_semantics<parallel>, #tpu.dimension_semantics<arbitrary>], iteration_bounds = array<i64: 2, 1>, scalar_prefetch = 0 : i64, scratch_operands = 5 : i64, tpu.core_type = #tpu.core_type<tc>, window_params = [{}, {pipeline_mode = #tpu.pipeline_mode<synchronous>, transform_indices = @transform_1, window_bounds = array<i64: 16, 16>}, {pipeline_mode = #tpu.pipeline_mode<synchronous>, transform_indices = @transform_2, window_bounds = array<i64: 16, 1>}, {pipeline_mode = #tpu.pipeline_mode<synchronous>, transform_indices = @transform_3, window_bounds = array<i64: 16, 1>}, {pipeline_mode = #tpu.pipeline_mode<synchronous>, transform_indices = @transform_4, window_bounds = array<i64: 48, 16>}, {pipeline_mode = #tpu.pipeline_mode<synchronous>, transform_indices = @transform_5, window_bounds = array<i64: 48, 1>}, {pipeline_mode = #tpu.pipeline_mode<synchronous>, transform_indices = @transform_6, window_bounds = array<i64: 16, 16>}, {pipeline_mode = #tpu.pipeline_mode<synchronous>, transform_indices = @transform_7, window_bounds = array<i64: 16, 1>}, {transform_indices = @transform_8, window_bounds = array<i64: 1, 16, 128>}]} {
    %c0_i32 = arith.constant 0 : i32
    %0 = arith.cmpi eq, %arg1, %c0_i32 : i32
    %1 = arith.extui %0 : i1 to i32
    %c0_i32_0 = arith.constant 0 : i32
    %2 = arith.cmpi ne, %1, %c0_i32_0 : i32
    scf.if %2 {
      %c0_i32_20 = arith.constant 0 : i32
      %c0_i32_21 = arith.constant 0 : i32
      %38 = tpu.memref_slice %arg2[%arg0, %c0_i32_20, %c0_i32_21] : memref<2x16x128xf32, #tpu.memory_space<any>> -> memref<1x16x128xf32, #tpu.memory_space<any>>
      %39 = tpu.memref_squeeze %38 : memref<1x16x128xf32, #tpu.memory_space<any>> -> memref<16x128xf32, #tpu.memory_space<any>>
      tpu.enqueue_dma source(%39 : memref<16x128xf32, #tpu.memory_space<any>>) target(%arg11 : memref<16x128xf32, #tpu.memory_space<vmem>>) target_semaphore(%arg15 : memref<!tpu.dma_semaphore, #tpu.memory_space<semaphore_mem>>)
      %c0_i32_22 = arith.constant 0 : i32
      %c0_i32_23 = arith.constant 0 : i32
      %40 = tpu.memref_slice %arg2[%arg0, %c0_i32_22, %c0_i32_23] : memref<2x16x128xf32, #tpu.memory_space<any>> -> memref<1x16x128xf32, #tpu.memory_space<any>>
      %41 = tpu.memref_squeeze %40 : memref<1x16x128xf32, #tpu.memory_space<any>> -> memref<16x128xf32, #tpu.memory_space<any>>
      tpu.wait_dma2 semaphore(%arg15 : memref<!tpu.dma_semaphore, #tpu.memory_space<semaphore_mem>>) src(%41 : memref<16x128xf32, #tpu.memory_space<any>>) dst(%arg11 : memref<16x128xf32, #tpu.memory_space<vmem>>)
      %c0_24 = arith.constant 0 : index
      %c0_25 = arith.constant 0 : index
      %42 = vector.load %arg11[%c0_24, %c0_25] : memref<16x128xf32, #tpu.memory_space<vmem>>, vector<16x128xf32>
      %cst_26 = arith.constant dense<0.000000e+00> : vector<16xf32>
      %43 = vector.multi_reduction <add>, %42, %cst_26 [1] : vector<16x128xf32> to vector<16xf32>
      %44 = vector.shape_cast %43 : vector<16xf32> to vector<16x1xf32>
      %c0_27 = arith.constant 0 : index
      %c0_28 = arith.constant 0 : index
      %45 = vector.load %arg3[%c0_27, %c0_28] : memref<16x16xf32, #tpu.memory_space<vmem>>, vector<16x16xf32>
      %cst_29 = arith.constant dense<0.000000e+00> : vector<16x1xf32>
      %46 = tpu.matmul %45, %44, %cst_29 {dimension_numbers = #tpu.dot_dimension_numbers<[1], [0], [0], [1], [0, 0, 1, 1], [], []>} : vector<16x16xf32>, vector<16x1xf32>, vector<16x1xf32> -> vector<16x1xf32>
      %47 = vector.broadcast %46 : vector<16x1xf32> to vector<16x128xf32>
      %48 = arith.subf %42, %47 : vector<16x128xf32>
      %49 = tpu.iota {dimensions = array<i32: 1>} : vector<16x128xi32>
      %c64_i32_30 = arith.constant 64 : i32
      %50 = vector.broadcast %c64_i32_30 : i32 to vector<16x128xi32>
      %51 = arith.cmpi slt, %49, %50 : vector<16x128xi32>
      %cst_31 = arith.constant 0.000000e+00 : f32
      %52 = vector.broadcast %cst_31 : f32 to vector<16x128xf32>
      %53 = arith.select %51, %48, %52 : vector<16x128xi1>, vector<16x128xf32>
      %54 = arith.mulf %53, %53 : vector<16x128xf32>
      %cst_32 = arith.constant dense<0.000000e+00> : vector<16xf32>
      %55 = vector.multi_reduction <add>, %54, %cst_32 [1] : vector<16x128xf32> to vector<16xf32>
      %56 = vector.shape_cast %55 : vector<16xf32> to vector<16x1xf32>
      %c0_33 = arith.constant 0 : index
      %c0_34 = arith.constant 0 : index
      %57 = vector.load %arg3[%c0_33, %c0_34] : memref<16x16xf32, #tpu.memory_space<vmem>>, vector<16x16xf32>
      %cst_35 = arith.constant dense<0.000000e+00> : vector<16x1xf32>
      %58 = tpu.matmul %57, %56, %cst_35 {dimension_numbers = #tpu.dot_dimension_numbers<[1], [0], [0], [1], [0, 0, 1, 1], [], []>} : vector<16x16xf32>, vector<16x1xf32>, vector<16x1xf32> -> vector<16x1xf32>
      %cst_36 = arith.constant 9.99999997E-7 : f32
      %59 = vector.broadcast %cst_36 : f32 to vector<16x1xf32>
      %60 = arith.addf %58, %59 : vector<16x1xf32>
      %61 = math.rsqrt %60 : vector<16x1xf32>
      %62 = vector.broadcast %61 : vector<16x1xf32> to vector<16x128xf32>
      %63 = arith.mulf %53, %62 : vector<16x128xf32>
      %c0_37 = arith.constant 0 : index
      %c0_38 = arith.constant 0 : index
      %64 = vector.load %arg4[%c0_37, %c0_38] : memref<16x1xf32, #tpu.memory_space<vmem>>, vector<16x1xf32>
      %65 = vector.broadcast %64 : vector<16x1xf32> to vector<16x128xf32>
      %66 = arith.mulf %63, %65 : vector<16x128xf32>
      %c0_39 = arith.constant 0 : index
      %c0_40 = arith.constant 0 : index
      %67 = vector.load %arg5[%c0_39, %c0_40] : memref<16x1xf32, #tpu.memory_space<vmem>>, vector<16x1xf32>
      %68 = vector.broadcast %67 : vector<16x1xf32> to vector<16x128xf32>
      %69 = arith.addf %66, %68 : vector<16x128xf32>
      %c0_41 = arith.constant 0 : index
      %c0_42 = arith.constant 0 : index
      %70 = vector.load %arg11[%c0_41, %c0_42] : memref<16x128xf32, #tpu.memory_space<vmem>>, vector<16x128xf32>
      tpu.vector_store %arg11[%c0_41, %c0_42], %69 {strides = array<i32>} : memref<16x128xf32, #tpu.memory_space<vmem>>, vector<16x128xf32>,
      %c0_43 = arith.constant 0 : index
      %c0_44 = arith.constant 0 : index
      %71 = vector.load %arg6[%c0_43, %c0_44] : memref<48x16xf32, #tpu.memory_space<vmem>>, vector<48x16xf32>
      %cst_45 = arith.constant dense<0.000000e+00> : vector<48x128xf32>
      %72 = tpu.matmul %71, %69, %cst_45 {dimension_numbers = #tpu.dot_dimension_numbers<[1], [0], [0], [1], [0, 0, 1, 1], [], []>} : vector<48x16xf32>, vector<16x128xf32>, vector<48x128xf32> -> vector<48x128xf32>
      %c0_46 = arith.constant 0 : index
      %c0_47 = arith.constant 0 : index
      %73 = vector.load %arg7[%c0_46, %c0_47] : memref<48x1xf32, #tpu.memory_space<vmem>>, vector<48x1xf32>
      %74 = vector.broadcast %73 : vector<48x1xf32> to vector<48x128xf32>
      %75 = arith.addf %72, %74 : vector<48x128xf32>
      %76 = vector.extract_strided_slice %75 {offsets = [0, 0], sizes = [16, 128], strides = [1, 1]} : vector<48x128xf32> to vector<16x128xf32>
      %c0_48 = arith.constant 0 : index
      %c0_49 = arith.constant 0 : index
      %77 = vector.load %arg12[%c0_48, %c0_49] : memref<16x128xf32, #tpu.memory_space<vmem>>, vector<16x128xf32>
      tpu.vector_store %arg12[%c0_48, %c0_49], %76 {strides = array<i32>} : memref<16x128xf32, #tpu.memory_space<vmem>>, vector<16x128xf32>,
      %78 = vector.extract_strided_slice %75 {offsets = [16, 0], sizes = [16, 128], strides = [1, 1]} : vector<48x128xf32> to vector<16x128xf32>
      %c0_50 = arith.constant 0 : index
      %c0_51 = arith.constant 0 : index
      %79 = vector.load %arg13[%c0_50, %c0_51] : memref<16x128xf32, #tpu.memory_space<vmem>>, vector<16x128xf32>
      tpu.vector_store %arg13[%c0_50, %c0_51], %78 {strides = array<i32>} : memref<16x128xf32, #tpu.memory_space<vmem>>, vector<16x128xf32>,
      %80 = vector.extract_strided_slice %75 {offsets = [32, 0], sizes = [16, 128], strides = [1, 1]} : vector<48x128xf32> to vector<16x128xf32>
      %c0_52 = arith.constant 0 : index
      %c0_53 = arith.constant 0 : index
      %81 = vector.load %arg14[%c0_52, %c0_53] : memref<16x128xf32, #tpu.memory_space<vmem>>, vector<16x128xf32>
      tpu.vector_store %arg14[%c0_52, %c0_53], %80 {strides = array<i32>} : memref<16x128xf32, #tpu.memory_space<vmem>>, vector<16x128xf32>,
    } else {
    }
    %c128_i32 = arith.constant 128 : i32
    %3 = arith.muli %arg1, %c128_i32 : i32
    %4 = tpu.assume_multiple %3, 128 : i32
    %c0 = arith.constant 0 : index
    %5 = arith.index_cast %4 : i32 to index
    %6 = vector.load %arg12[%c0, %5] : memref<16x128xf32, #tpu.memory_space<vmem>>, vector<16x128xf32>
    %c0_1 = arith.constant 0 : index
    %c0_2 = arith.constant 0 : index
    %7 = vector.load %arg13[%c0_1, %c0_2] : memref<16x128xf32, #tpu.memory_space<vmem>>, vector<16x128xf32>
    %cst = arith.constant dense<0.000000e+00> : vector<128x128xf32>
    %8 = tpu.matmul %6, %7, %cst {dimension_numbers = #tpu.dot_dimension_numbers<[0], [0], [1], [1], [0, 1, 1, 1], [], []>} : vector<16x128xf32>, vector<16x128xf32>, vector<128x128xf32> -> vector<128x128xf32>
    %9 = tpu.iota {dimensions = array<i32: 1>} : vector<128x128xi32>
    %c64_i32 = arith.constant 64 : i32
    %10 = vector.broadcast %c64_i32 : i32 to vector<128x128xi32>
    %11 = arith.cmpi slt, %9, %10 : vector<128x128xi32>
    %cst_3 = arith.constant -1.000000e+30 : f32
    %12 = vector.broadcast %cst_3 : f32 to vector<128x128xf32>
    %13 = arith.select %11, %8, %12 : vector<128x128xi1>, vector<128x128xf32>
    %cst_4 = arith.constant dense<0xFF800000> : vector<128xf32>
    %14 = vector.multi_reduction <maximumf>, %13, %cst_4 [1] : vector<128x128xf32> to vector<128xf32>
    %15 = vector.shape_cast %14 : vector<128xf32> to vector<128x1xf32>
    %16 = vector.broadcast %15 : vector<128x1xf32> to vector<128x128xf32>
    %17 = arith.subf %13, %16 : vector<128x128xf32>
    %18 = math.exp %17 : vector<128x128xf32>
    %cst_5 = arith.constant 1.000000e+00 : f32
    %19 = vector.broadcast %cst_5 : f32 to vector<1x128xf32>
    %cst_6 = arith.constant dense<0.000000e+00> : vector<1x128xf32>
    %20 = tpu.matmul %19, %18, %cst_6 {dimension_numbers = #tpu.dot_dimension_numbers<[1], [1], [0], [0], [0, 0, 1, 0], [], []>} : vector<1x128xf32>, vector<128x128xf32>, vector<1x128xf32> -> vector<1x128xf32>
    %c0_7 = arith.constant 0 : index
    %c0_8 = arith.constant 0 : index
    %21 = vector.load %arg14[%c0_7, %c0_8] : memref<16x128xf32, #tpu.memory_space<vmem>>, vector<16x128xf32>
    %cst_9 = arith.constant dense<0.000000e+00> : vector<16x128xf32>
    %22 = tpu.matmul %21, %18, %cst_9 {dimension_numbers = #tpu.dot_dimension_numbers<[1], [1], [0], [0], [0, 0, 1, 0], [], []>} : vector<16x128xf32>, vector<128x128xf32>, vector<16x128xf32> -> vector<16x128xf32>
    %cst_10 = arith.constant 1.000000e+00 : f32
    %23 = vector.broadcast %cst_10 : f32 to vector<1x128xf32>
    %24 = arith.divf %23, %20 : vector<1x128xf32>
    %25 = vector.broadcast %24 : vector<1x128xf32> to vector<16x128xf32>
    %26 = arith.mulf %22, %25 : vector<16x128xf32>
    %c0_11 = arith.constant 0 : index
    %c0_12 = arith.constant 0 : index
    %27 = vector.load %arg8[%c0_11, %c0_12] : memref<16x16xf32, #tpu.memory_space<vmem>>, vector<16x16xf32>
    %cst_13 = arith.constant dense<0.000000e+00> : vector<16x128xf32>
    %28 = tpu.matmul %27, %26, %cst_13 {dimension_numbers = #tpu.dot_dimension_numbers<[1], [0], [0], [1], [0, 0, 1, 1], [], []>} : vector<16x16xf32>, vector<16x128xf32>, vector<16x128xf32> -> vector<16x128xf32>
    %c0_14 = arith.constant 0 : index
    %c0_15 = arith.constant 0 : index
    %29 = vector.load %arg9[%c0_14, %c0_15] : memref<16x1xf32, #tpu.memory_space<vmem>>, vector<16x1xf32>
    %30 = vector.broadcast %29 : vector<16x1xf32> to vector<16x128xf32>
    %31 = arith.addf %28, %30 : vector<16x128xf32>
    %c0_16 = arith.constant 0 : index
    %32 = arith.index_cast %4 : i32 to index
    %33 = vector.load %arg11[%c0_16, %32] : memref<16x128xf32, #tpu.memory_space<vmem>>, vector<16x128xf32>
    %34 = arith.addf %33, %31 : vector<16x128xf32>
    %c0_17 = arith.constant 0 : index
    %c0_18 = arith.constant 0 : index
    %c0_19 = arith.constant 0 : index
    %35 = vector.load %arg10[%c0_17, %c0_18, %c0_19] : memref<1x16x128xf32, #tpu.memory_space<vmem>>, vector<1x16x128xf32>
    %36 = vector.shape_cast %35 : vector<1x16x128xf32> to vector<16x128xf32>
    %37 = vector.shape_cast %34 : vector<16x128xf32> to vector<1x16x128xf32>
    tpu.vector_store %arg10[%c0_17, %c0_18, %c0_19], %37 {strides = array<i32>} : memref<1x16x128xf32, #tpu.memory_space<vmem>>, vector<1x16x128xf32>,
    return
  }
  func.func @transform_1(%arg0: i32, %arg1: i32) -> (i32, i32) {
    %c0_i32 = arith.constant 0 : i32
    %c0_i32_0 = arith.constant 0 : i32
    %c0_i32_1 = arith.constant 0 : i32
    return %c0_i32, %c0_i32_0 : i32, i32
  }
  func.func @transform_2(%arg0: i32, %arg1: i32) -> (i32, i32) {
    %c0_i32 = arith.constant 0 : i32
    %c0_i32_0 = arith.constant 0 : i32
    %c0_i32_1 = arith.constant 0 : i32
    return %c0_i32, %c0_i32_0 : i32, i32
  }
  func.func @transform_3(%arg0: i32, %arg1: i32) -> (i32, i32) {
    %c0_i32 = arith.constant 0 : i32
    %c0_i32_0 = arith.constant 0 : i32
    %c0_i32_1 = arith.constant 0 : i32
    return %c0_i32, %c0_i32_0 : i32, i32
  }
  func.func @transform_4(%arg0: i32, %arg1: i32) -> (i32, i32) {
    %c0_i32 = arith.constant 0 : i32
    %c0_i32_0 = arith.constant 0 : i32
    %c0_i32_1 = arith.constant 0 : i32
    return %c0_i32, %c0_i32_0 : i32, i32
  }
  func.func @transform_5(%arg0: i32, %arg1: i32) -> (i32, i32) {
    %c0_i32 = arith.constant 0 : i32
    %c0_i32_0 = arith.constant 0 : i32
    %c0_i32_1 = arith.constant 0 : i32
    return %c0_i32, %c0_i32_0 : i32, i32
  }
  func.func @transform_6(%arg0: i32, %arg1: i32) -> (i32, i32) {
    %c0_i32 = arith.constant 0 : i32
    %c0_i32_0 = arith.constant 0 : i32
    %c0_i32_1 = arith.constant 0 : i32
    return %c0_i32, %c0_i32_0 : i32, i32
  }
  func.func @transform_7(%arg0: i32, %arg1: i32) -> (i32, i32) {
    %c0_i32 = arith.constant 0 : i32
    %c0_i32_0 = arith.constant 0 : i32
    %c0_i32_1 = arith.constant 0 : i32
    return %c0_i32, %c0_i32_0 : i32, i32
  }
  func.func @transform_8(%arg0: i32, %arg1: i32) -> (i32, i32, i32) {
    %c0_i32 = arith.constant 0 : i32
    %c0_i32_0 = arith.constant 0 : i32
    return %arg0, %c0_i32, %arg1 : i32, i32, i32
  }
}

</mosaic_0001>

<llo_original>
// kernel: tpu_custom_call.1
$region0: #{tpu_custom_call.1}
  #allocation0 [shape = 'u32[]', space=smem, size = 0x4, offset = 0x4, fixed_abs, tag = 'smem constant byte address 0x4 - core index']
  #allocation1 [shape = 'u32[144,128]{1,0:T(1,128)}', space=vmem, size = 0x12000, scoped, tag = 'internal scratch']
  #allocation2 [shape = 'f32[16,128]{1,0:T(8,128)}', space=vmem, size = 0x2000, scoped, tag = 'scratch operand']
  #allocation3 [shape = 'f32[16,128]{1,0:T(8,128)}', space=vmem, size = 0x2000, scoped, tag = 'scratch operand']
  #allocation4 [shape = 'f32[16,128]{1,0:T(8,128)}', space=vmem, size = 0x2000, scoped, tag = 'scratch operand']
  #allocation5 [shape = 'f32[16,128]{1,0:T(8,128)}', space=vmem, size = 0x2000, scoped, tag = 'scratch operand']
  #allocation6 [shape = 's32[1]{0}', space=sflag, size = 0x4, scoped, tag = 'scratch operand']
  #allocation9 [shape = 's32[]', space=sflag, size = 0x4, offset = 0, fixed_abs, tag = 'sflag constant byte address 0x0 - dummy sync flag']
  %s0 = inlined_call_operand.vmem [shape: f32[2,16,128], index: 0, kind: input, shape index: {}]
  %s1 = inlined_call_operand.vmem [shape: f32[16,16], index: 1, kind: input, shape index: {}]
  %s2 = inlined_call_operand.vmem [shape: f32[16,1], index: 2, kind: input, shape index: {}]
  %s3 = inlined_call_operand.vmem [shape: f32[16,1], index: 3, kind: input, shape index: {}]
  %s4 = inlined_call_operand.vmem [shape: f32[48,16], index: 4, kind: input, shape index: {}]
  %s5 = inlined_call_operand.vmem [shape: f32[48,1], index: 5, kind: input, shape index: {}]
  %s6 = inlined_call_operand.vmem [shape: f32[16,16], index: 6, kind: input, shape index: {}]
  %s7 = inlined_call_operand.vmem [shape: f32[16,1], index: 7, kind: input, shape index: {}]
  %s8 = inlined_call_operand.hbm [shape: f32[2,16,128], index: 8, kind: output, shape index: {}]
  %s9 = sld [smem:[#allocation0]]
  $region99: #{tpu_custom_call.1} parent=0
    _
  %s11 = ssub.s32 1, %s9
  %s12 = scalar_select 0, %s11, %s9
  $region1: #{tpu_custom_call.1} parent=0
    #allocation7 [shape = 'u8[16384]{0}', space=vmem, size = 0x4000, scoped, tag = 'output window, operand 0']
    #allocation8 [shape = 's32[2]{0}', space=sflag, size = 0x8, scoped, tag = 'scoped memory for tpu_custom_call.1']
    %13 = vsyncpa [#allocation8], 0
    %s14 = scalar_lea.sflag [#allocation8], 1
    %15 = vsyncpa %s14, 0
    loop: start=0, step=1, limit=4
    $region2: #{tpu_custom_call.1} parent=1 // loop_pre_header
      _
    $region3: #{tpu_custom_call.1} parent=1 // loop_header
      %s17 = sphi 0, %s21
      %p18 = scmp.ge.s32.totalorder %s17, 4
      %s24 = sphi 0, %s36
      %s25 = sphi 0, %s32
      %s26 = sphi 0, %s24
      %s27 = sphi 0, %s25
      %s28 = sphi 0, %s26
      %s29 = sphi 0, %s27
      %s37 = sphi 0, %s37
      %s39 = sphi 0, %s37
      %s40 = sphi 0, %s39
      %s54 = sphi 0, %s40
      %s58 = sphi 0, %s58
      %s60 = sphi 0, %s58
      %s61 = sphi 0, %s60
      %s75 = sphi 0, %s61
      %s79 = sphi 0, %s79
      %s81 = sphi 0, %s79
      %s82 = sphi 0, %s81
      %s96 = sphi 0, %s82
      %s100 = sphi 0, %s100
      %s102 = sphi 0, %s100
      %s103 = sphi 0, %s102
      %s117 = sphi 0, %s103
      %s121 = sphi 0, %s121
      %s123 = sphi 0, %s121
      %s124 = sphi 0, %s123
      %s138 = sphi 0, %s124
      %s142 = sphi 0, %s142
      %s144 = sphi 0, %s142
      %s145 = sphi 0, %s144
      %s159 = sphi 0, %s145
      %s163 = sphi 0, %s163
      %s165 = sphi 0, %s163
      %s166 = sphi 0, %s165
      %s180 = sphi 0, %s166
      %s188 = sphi 0, %s190
      %s191 = sphi 0, %s188
      %s192 = sphi 0, %s191
      %s208 = sphi 0, %s192
    $region4: #{tpu_custom_call.1} parent=1 // loop_header_branch
      %20 = sbr.rel (%p18) target = $region8
    $region5: #{tpu_custom_call.1} parent=1 // loop_body
      %s22 = ssub.s32 %s17, 1
      %s23 = ssub.s32 %s17, 2
      %s30 = sadd.s32 1, %s25
      %p31 = scmp.ge.s32.totalorder %s30, 1
      %s32 = scalar_select %p31, 0, %s30
      %s33 = sadd.s32 1, %s24
      %s34 = scalar_select %p31, %s33, %s24
      %p35 = scmp.ge.s32.totalorder %s34, 2
      %s36 = scalar_select %p35, 0, %s34
      %s38 = sadd.s32 %s37, 1
      %p41 = scmp.eq.s32.totalorder %s17, 1
      %p42 = scmp.ne.s32.totalorder %s37, %s39
      %p43 = scmp.eq.s32.totalorder %s17, 0
      %p44 = por %p42, %p43
      %p45 = scmp.ne.s32.totalorder %s37, %s39
      %p46 = scmp.eq.s32.totalorder %s22, 1
      %p47 = por %p45, %p46
      %p48 = scmp.ne.s32.totalorder %s39, %s40
      %p49 = scmp.eq.s32.totalorder %s22, 0
      %p50 = por %p48, %p49
      %p51 = scmp.ne.s32.totalorder %s39, %s40
      %p52 = scmp.eq.s32.totalorder %s23, 1
      %p53 = por %p51, %p52
      %p55 = scmp.ne.s32.totalorder %s40, %s54
      %p56 = scmp.eq.s32.totalorder %s23, 0
      %p57 = por %p55, %p56
      %s59 = sadd.s32 %s58, 1
      %p62 = scmp.eq.s32.totalorder %s17, 1
      %p63 = scmp.ne.s32.totalorder %s58, %s60
      %p64 = scmp.eq.s32.totalorder %s17, 0
      %p65 = por %p63, %p64
      %p66 = scmp.ne.s32.totalorder %s58, %s60
      %p67 = scmp.eq.s32.totalorder %s22, 1
      %p68 = por %p66, %p67
      %p69 = scmp.ne.s32.totalorder %s60, %s61
      %p70 = scmp.eq.s32.totalorder %s22, 0
      %p71 = por %p69, %p70
      %p72 = scmp.ne.s32.totalorder %s60, %s61
      %p73 = scmp.eq.s32.totalorder %s23, 1
      %p74 = por %p72, %p73
      %p76 = scmp.ne.s32.totalorder %s61, %s75
      %p77 = scmp.eq.s32.totalorder %s23, 0
      %p78 = por %p76, %p77
      %s80 = sadd.s32 %s79, 1
      %p83 = scmp.eq.s32.totalorder %s17, 1
      %p84 = scmp.ne.s32.totalorder %s79, %s81
      %p85 = scmp.eq.s32.totalorder %s17, 0
      %p86 = por %p84, %p85
      %p87 = scmp.ne.s32.totalorder %s79, %s81
      %p88 = scmp.eq.s32.totalorder %s22, 1
      %p89 = por %p87, %p88
      %p90 = scmp.ne.s32.totalorder %s81, %s82
      %p91 = scmp.eq.s32.totalorder %s22, 0
      %p92 = por %p90, %p91
      %p93 = scmp.ne.s32.totalorder %s81, %s82
      %p94 = scmp.eq.s32.totalorder %s23, 1
      %p95 = por %p93, %p94
      %p97 = scmp.ne.s32.totalorder %s82, %s96
      %p98 = scmp.eq.s32.totalorder %s23, 0
      %p99 = por %p97, %p98
      %s101 = sadd.s32 %s100, 1
      %p104 = scmp.eq.s32.totalorder %s17, 1
      %p105 = scmp.ne.s32.totalorder %s100, %s102
      %p106 = scmp.eq.s32.totalorder %s17, 0
      %p107 = por %p105, %p106
      %p108 = scmp.ne.s32.totalorder %s100, %s102
      %p109 = scmp.eq.s32.totalorder %s22, 1
      %p110 = por %p108, %p109
      %p111 = scmp.ne.s32.totalorder %s102, %s103
      %p112 = scmp.eq.s32.totalorder %s22, 0
      %p113 = por %p111, %p112
      %p114 = scmp.ne.s32.totalorder %s102, %s103
      %p115 = scmp.eq.s32.totalorder %s23, 1
      %p116 = por %p114, %p115
      %p118 = scmp.ne.s32.totalorder %s103, %s117
      %p119 = scmp.eq.s32.totalorder %s23, 0
      %p120 = por %p118, %p119
      %s122 = sadd.s32 %s121, 1
      %p125 = scmp.eq.s32.totalorder %s17, 1
      %p126 = scmp.ne.s32.totalorder %s121, %s123
      %p127 = scmp.eq.s32.totalorder %s17, 0
      %p128 = por %p126, %p127
      %p129 = scmp.ne.s32.totalorder %s121, %s123
      %p130 = scmp.eq.s32.totalorder %s22, 1
      %p131 = por %p129, %p130
      %p132 = scmp.ne.s32.totalorder %s123, %s124
      %p133 = scmp.eq.s32.totalorder %s22, 0
      %p134 = por %p132, %p133
      %p135 = scmp.ne.s32.totalorder %s123, %s124
      %p136 = scmp.eq.s32.totalorder %s23, 1
      %p137 = por %p135, %p136
      %p139 = scmp.ne.s32.totalorder %s124, %s138
      %p140 = scmp.eq.s32.totalorder %s23, 0
      %p141 = por %p139, %p140
      %s143 = sadd.s32 %s142, 1
      %p146 = scmp.eq.s32.totalorder %s17, 1
      %p147 = scmp.ne.s32.totalorder %s142, %s144
      %p148 = scmp.eq.s32.totalorder %s17, 0
      %p149 = por %p147, %p148
      %p150 = scmp.ne.s32.totalorder %s142, %s144
      %p151 = scmp.eq.s32.totalorder %s22, 1
      %p152 = por %p150, %p151
      %p153 = scmp.ne.s32.totalorder %s144, %s145
      %p154 = scmp.eq.s32.totalorder %s22, 0
      %p155 = por %p153, %p154
      %p156 = scmp.ne.s32.totalorder %s144, %s145
      %p157 = scmp.eq.s32.totalorder %s23, 1
      %p158 = por %p156, %p157
      %p160 = scmp.ne.s32.totalorder %s145, %s159
      %p161 = scmp.eq.s32.totalorder %s23, 0
      %p162 = por %p160, %p161
      %s164 = sadd.s32 %s163, 1
      %p167 = scmp.eq.s32.totalorder %s17, 1
      %p168 = scmp.ne.s32.totalorder %s163, %s165
      %p169 = scmp.eq.s32.totalorder %s17, 0
      %p170 = por %p168, %p169
      %p171 = scmp.ne.s32.totalorder %s163, %s165
      %p172 = scmp.eq.s32.totalorder %s22, 1
      %p173 = por %p171, %p172
      %p174 = scmp.ne.s32.totalorder %s165, %s166
      %p175 = scmp.eq.s32.totalorder %s22, 0
      %p176 = por %p174, %p175
      %p177 = scmp.ne.s32.totalorder %s165, %s166
      %p178 = scmp.eq.s32.totalorder %s23, 1
      %p179 = por %p177, %p178
      %p181 = scmp.ne.s32.totalorder %s166, %s180
      %p182 = scmp.eq.s32.totalorder %s23, 0
      %p183 = por %p181, %p182
      %s184 = ssub.s32 %s24, %s36
      %s185 = ssub.s32 %s25, %s32
      %s186 = sor.u32 %s184, %s185
      %p187 = scmp.eq.s32.totalorder %s186, 0
      %s189 = sadd.s32 %s188, 1
      %s190 = scalar_select %p187, %s188, %s189
      %p193 = pneg %p187
      %p194 = scmp.eq.s32.totalorder %s17, 1
      %p195 = por %p193, %p194
      %p196 = scmp.ne.s32.totalorder %s188, %s191
      %p197 = scmp.eq.s32.totalorder %s17, 0
      %p198 = por %p196, %p197
      %p199 = scmp.ne.s32.totalorder %s188, %s191
      %p200 = scmp.eq.s32.totalorder %s22, 1
      %p201 = por %p199, %p200
      %p202 = scmp.ne.s32.totalorder %s191, %s192
      %p203 = scmp.eq.s32.totalorder %s22, 0
      %p204 = por %p202, %p203
      %p205 = scmp.ne.s32.totalorder %s191, %s192
      %p206 = scmp.eq.s32.totalorder %s23, 1
      %p207 = por %p205, %p206
      %p209 = scmp.ne.s32.totalorder %s192, %s208
      %p210 = scmp.eq.s32.totalorder %s23, 0
      %p211 = por %p209, %p210
      %p212 = scmp.le.s32.totalorder 1, %s17
      %p213 = scmp.lt.s32.totalorder %s17, 3
      %p214 = pnand %p212, %p213
      %p215 = pneg %p214
      // Predicated region
      $region9: #{tpu_custom_call.1} parent=5 // pred_check
        _
      $region10: #{tpu_custom_call.1} parent=5 // pred_check_branch
        %217 = sbr.rel (%p214) target = $region12
      $region11: #{tpu_custom_call.1} parent=5 // pred_region
        %s218 = ssub.s32 %s17, 1
        // Predicated region
        $region13: #{tpu_custom_call.1} parent=11 // pred_check
          %p219 = pneg %p50
        $region14: #{tpu_custom_call.1} parent=11 // pred_check_branch
          %221 = sbr.rel (%p219) target = $region16
        $region15: #{tpu_custom_call.1} parent=11 // pred_region
          _
        $region16: #{tpu_custom_call.1} parent=11 // pred_fallthru
          _
        // Predicated region
        $region17: #{tpu_custom_call.1} parent=11 // pred_check
          %p222 = pneg %p71
        $region18: #{tpu_custom_call.1} parent=11 // pred_check_branch
          %224 = sbr.rel (%p222) target = $region20
        $region19: #{tpu_custom_call.1} parent=11 // pred_region
          _
        $region20: #{tpu_custom_call.1} parent=11 // pred_fallthru
          _
        // Predicated region
        $region21: #{tpu_custom_call.1} parent=11 // pred_check
          %p225 = pneg %p92
        $region22: #{tpu_custom_call.1} parent=11 // pred_check_branch
          %227 = sbr.rel (%p225) target = $region24
        $region23: #{tpu_custom_call.1} parent=11 // pred_region
          _
        $region24: #{tpu_custom_call.1} parent=11 // pred_fallthru
          _
        // Predicated region
        $region25: #{tpu_custom_call.1} parent=11 // pred_check
          %p228 = pneg %p113
        $region26: #{tpu_custom_call.1} parent=11 // pred_check_branch
          %230 = sbr.rel (%p228) target = $region28
        $region27: #{tpu_custom_call.1} parent=11 // pred_region
          _
        $region28: #{tpu_custom_call.1} parent=11 // pred_fallthru
          _
        // Predicated region
        $region29: #{tpu_custom_call.1} parent=11 // pred_check
          %p231 = pneg %p134
        $region30: #{tpu_custom_call.1} parent=11 // pred_check_branch
          %233 = sbr.rel (%p231) target = $region32
        $region31: #{tpu_custom_call.1} parent=11 // pred_region
          _
        $region32: #{tpu_custom_call.1} parent=11 // pred_fallthru
          _
        // Predicated region
        $region33: #{tpu_custom_call.1} parent=11 // pred_check
          %p234 = pneg %p155
        $region34: #{tpu_custom_call.1} parent=11 // pred_check_branch
          %236 = sbr.rel (%p234) target = $region36
        $region35: #{tpu_custom_call.1} parent=11 // pred_region
          _
        $region36: #{tpu_custom_call.1} parent=11 // pred_fallthru
          _
        // Predicated region
        $region37: #{tpu_custom_call.1} parent=11 // pred_check
          %p237 = pneg %p176
        $region38: #{tpu_custom_call.1} parent=11 // pred_check_branch
          %239 = sbr.rel (%p237) target = $region40
        $region39: #{tpu_custom_call.1} parent=11 // pred_region
          _
        $region40: #{tpu_custom_call.1} parent=11 // pred_fallthru
          _
      $region12: #{tpu_custom_call.1} parent=5 // pred_fallthru
        _
      %p240 = scmp.lt.s32.totalorder %s17, 2
      // Predicated region
      $region41: #{tpu_custom_call.1} parent=5 // pred_check
        %p241 = pneg %p240
      $region42: #{tpu_custom_call.1} parent=5 // pred_check_branch
        %243 = sbr.rel (%p241) target = $region44
      $region43: #{tpu_custom_call.1} parent=5 // pred_region
        _
      $region44: #{tpu_custom_call.1} parent=5 // pred_fallthru
        _
      %p244 = scmp.le.s32.totalorder 1, %s17
      %p245 = scmp.lt.s32.totalorder %s17, 3
      %p246 = pnand %p244, %p245
      %p247 = pneg %p246
      // Predicated region
      $region45: #{tpu_custom_call.1} parent=5 // pred_check
        _
      $region46: #{tpu_custom_call.1} parent=5 // pred_check_branch
        %249 = sbr.rel (%p246) target = $region48
      $region47: #{tpu_custom_call.1} parent=5 // pred_region
        %s250 = ssub.s32 %s17, 1
        %p251 = pneg %p50
        %p252 = pneg %p47
        %p253 = pneg %p71
        %p254 = pneg %p68
        %p255 = pneg %p92
        %p256 = pneg %p89
        %p257 = pneg %p113
        %p258 = pneg %p110
        %p259 = pneg %p134
        %p260 = pneg %p131
        %p261 = pneg %p155
        %p262 = pneg %p152
        %p263 = pneg %p176
        %p264 = pneg %p173
        %p265 = pneg %p204
        %p266 = pneg %p201
        %s267 = sand.u32 %s191, 1
        %s268 = scalar_lea.sflag [#allocation8], %s267
        %s269 = sand.u32 %s191, 1
        %s270 = smul.addr %s269, 16
        %s271 = scalar_lea.vmem [#allocation7], %s270
        %p272 = scmp.eq.s32.totalorder %s27, 0
        // Predicated region
        $region49: #{tpu_custom_call.1} parent=47 // pred_check
          %p273 = pneg %p272
        $region50: #{tpu_custom_call.1} parent=47 // pred_check_branch
          %275 = sbr.rel (%p273) target = $region52
        $region51: #{tpu_custom_call.1} parent=47 // pred_region
          %s276 = smul.u32 %s26, 16
          %s277 = scalar_lea.vmem %s0, %s276
          %p279 = scmp.lt.u32.totalorder 16, 8
          %p280 = pneg %p279
          // Predicated region
          $region53: #{tpu_custom_call.1} parent=51 // pred_check
            _
          $region54: #{tpu_custom_call.1} parent=51 // pred_check_branch
            %282 = sbr.rel (%p279) target = $region56
          $region55: #{tpu_custom_call.1} parent=51 // pred_region
            %s297 = sand.u32 16, 7
            %p298 = scmp.eq.s32.totalorder %s297, 0
            // Predicated region
            $region68: #{tpu_custom_call.1} parent=55 // pred_check
              %p299 = pneg %p298
            $region69: #{tpu_custom_call.1} parent=55 // pred_check_branch
              %301 = sbr.rel (%p299) target = $region71
            $region70: #{tpu_custom_call.1} parent=55 // pred_region
              loop: start=0, step=1, limit=1
              $region72: #{tpu_custom_call.1} parent=70 // loop_pre_header
                _
              $region73: #{tpu_custom_call.1} parent=70 // loop_header
                %s303 = sphi 0, %s307
                %p304 = scmp.ge.s32.totalorder %s303, 1
                %s308 = sphi %s277, %s277
                %s309 = sphi [#allocation2], [#allocation2]
              $region74: #{tpu_custom_call.1} parent=70 // loop_header_branch
                %306 = sbr.rel (%p304) target = $region78
              $region75: #{tpu_custom_call.1} parent=70 // loop_body
                %v310 = vld [vmem:[%s308] sm:$0xff]
                %311 = vst [vmem:[%s309] sm:$0xff] %v310
                %v312 = vld [vmem:[%s308 + $0x8] sm:$0xff]
                %313 = vst [vmem:[%s309 + $0x8] sm:$0xff] %v312
              $region76: #{tpu_custom_call.1} parent=70 // loop_footer
                %s307 = sadd.s32 1, %s303
              $region77: #{tpu_custom_call.1} parent=70 // loop_footer_branch
                %302 = sbr.rel target = $region73
              $region78: #{tpu_custom_call.1} parent=70 // loop_exit
                _
            $region71: #{tpu_custom_call.1} parent=55 // pred_fallthru
              _
            %p314 = pneg %p298
            // Predicated region
            $region79: #{tpu_custom_call.1} parent=55 // pred_check
              _
            $region80: #{tpu_custom_call.1} parent=55 // pred_check_branch
              %316 = sbr.rel (%p298) target = $region82
            $region81: #{tpu_custom_call.1} parent=55 // pred_region
              %s317 = sand.u32 16, 7
            $region82: #{tpu_custom_call.1} parent=55 // pred_fallthru
              _
          $region56: #{tpu_custom_call.1} parent=51 // pred_fallthru
            _
          // Predicated region
          $region57: #{tpu_custom_call.1} parent=51 // pred_check
            %p283 = pneg %p279
          $region58: #{tpu_custom_call.1} parent=51 // pred_check_branch
            %285 = sbr.rel (%p283) target = $region60
          $region59: #{tpu_custom_call.1} parent=51 // pred_region
            %s286 = sshllo.u32 0, 16
            loop: start=0, step=1, limit=1
            $region61: #{tpu_custom_call.1} parent=59 // loop_pre_header
              _
            $region62: #{tpu_custom_call.1} parent=59 // loop_header
              %s288 = sphi 0, %s292
              %p289 = scmp.ge.s32.totalorder %s288, 1
              %s293 = sphi %s277, %s277
              %s294 = sphi [#allocation2], [#allocation2]
            $region63: #{tpu_custom_call.1} parent=59 // loop_header_branch
              %291 = sbr.rel (%p289) target = $region67
            $region64: #{tpu_custom_call.1} parent=59 // loop_body
              %v295 = vld [vmem:[%s293] sm:%s286]
              %296 = vst [vmem:[%s294] sm:%s286] %v295
            $region65: #{tpu_custom_call.1} parent=59 // loop_footer
              %s292 = sadd.s32 1, %s288
            $region66: #{tpu_custom_call.1} parent=59 // loop_footer_branch
              %287 = sbr.rel target = $region62
            $region67: #{tpu_custom_call.1} parent=59 // loop_exit
              _
          $region60: #{tpu_custom_call.1} parent=51 // pred_fallthru
            _
          // Predicated region
          $region83: #{tpu_custom_call.1} parent=51 // pred_check
            _
          $region84: #{tpu_custom_call.1} parent=51 // pred_check_branch
            %320 = sbr.rel (0) target = $region86
          $region85: #{tpu_custom_call.1} parent=51 // pred_region
            %321 = vsyncadd [#allocation6], 256
          $region86: #{tpu_custom_call.1} parent=51 // pred_fallthru
            _
          %s322 = smul.u32 16, 1
          %s323 = sshll.u32 %s322, 4
          %324 = dma.done [#allocation6], %s323
          %v325 = vld [vmem:[#allocation2] sm:$0xff]
          %v326 = vld [vmem:[#allocation2 + $0x8] sm:$0xff]
          %327 = vadd.xlane.f32.xlu0 %v325
          %v328 = vpop.xlane.xlu0 %327
          %329 = vadd.xlane.f32.xlu0 %v326
          %v330 = vpop.xlane.xlu0 %329
          %v331 = vld [vmem:[%s1] sm:$0xff]
          %v332 = vld [vmem:[%s1 + $0x8] sm:$0xff]
          %vm333 = vcmask 130048
          %v335 = vsel %vm333, %v331, 0
          %v338 = vsel %vm333, %v332, 0
          %340 = vmatprep.subr.mxu0 0.0
          %341 = vmatpush1.msra.mxu0 %v328
          %342 = vmatprep.subr.mxu0 0.0
          %343 = vmatpush1.msra.mxu0 %v330
          %344 = vmatprep.subr.mxu0 0.0
          %345 = vmatpush1.msra.mxu0 0.0
          %346 = vmatprep.subr.mxu0 0.0
          %347 = vmatpush1.msra.mxu0 0.0
          %348 = vmatprep.subr.mxu0 0.0
          %349 = vmatpush1.msra.mxu0 0.0
          %350 = vmatprep.subr.mxu0 0.0
          %351 = vmatpush1.msra.mxu0 0.0
          %352 = vmatprep.subr.mxu0 0.0
          %353 = vmatpush1.msra.mxu0 0.0
          %354 = vmatprep.subr.mxu0 0.0
          %355 = vmatpush1.msra.mxu0 0.0
          %356 = vmatprep.subr.mxu0 0.0
          %357 = vmatpush1.msra.mxu0 0.0
          %358 = vmatprep.subr.mxu0 0.0
          %359 = vmatpush1.msra.mxu0 0.0
          %360 = vmatprep.subr.mxu0 0.0
          %361 = vmatpush1.msra.mxu0 0.0
          %362 = vmatprep.subr.mxu0 0.0
          %363 = vmatpush1.msra.mxu0 0.0
          %364 = vmatprep.subr.mxu0 0.0
          %365 = vmatpush1.msra.mxu0 0.0
          %366 = vmatprep.subr.mxu0 0.0
          %367 = vmatpush1.msra.mxu0 0.0
          %368 = vmatprep.subr.mxu0 0.0
          %369 = vmatpush1.msra.mxu0 0.0
          %370 = vmatprep.subr.mxu0 0.0
          %371 = vmatpush1.msra.mxu0 0.0
          %372 = vmatprep.subr.mxu0 0.0
          %373 = vmatpush1.msra.mxu0 0.0
          %374 = vmatprep.subr.mxu0 0.0
          %375 = vmatpush1.msra.mxu0 0.0
          %376 = vmatprep.subr.mxu0 0.0
          %377 = vmatpush1.msra.mxu0 0.0
          %378 = vmatprep.subr.mxu0 0.0
          %379 = vmatpush1.msra.mxu0 0.0
          %380 = vmatprep.subr.mxu0 0.0
          %381 = vmatpush1.msra.mxu0 0.0
          %382 = vmatprep.subr.mxu0 0.0
          %383 = vmatpush1.msra.mxu0 0.0
          %384 = vmatprep.subr.mxu0 0.0
          %385 = vmatpush1.msra.mxu0 0.0
          %386 = vmatprep.subr.mxu0 0.0
          %387 = vmatpush1.msra.mxu0 0.0
          %388 = vmatprep.subr.mxu0 0.0
          %389 = vmatpush1.msra.mxu0 0.0
          %390 = vmatprep.subr.mxu0 0.0
          %391 = vmatpush1.msra.mxu0 0.0
          %392 = vmatprep.subr.mxu0 0.0
          %393 = vmatpush1.msra.mxu0 0.0
          %394 = vmatprep.subr.mxu0 0.0
          %395 = vmatpush1.msra.mxu0 0.0
          %396 = vmatprep.subr.mxu0 0.0
          %397 = vmatpush1.msra.mxu0 0.0
          %398 = vmatprep.subr.mxu0 0.0
          %399 = vmatpush1.msra.mxu0 0.0
          %400 = vmatprep.subr.mxu0 0.0
          %401 = vmatpush1.msra.mxu0 0.0
          %402 = vmatprep.subr.mxu0 0.0
          %403 = vmatpush1.msra.mxu0 0.0
          %404 = vmatprep.mubr.f32.mxu0 0.0
          %405 = vmatmul.mubr.f32.gmra.mrb[0].mxu0 %v335
          %v406 = vpop.f32.mrb[0].mxu0
          %v407 = vadd.f32 0.0, %v406
          %v408 = vpop.f32.mrb[0].mxu0
          %409 = vmatprep.mubr.f32.mxu0 0.0
          %410 = vmatmul.mubr.f32.gmra.mrb[0].mxu0 %v338
          %v411 = vpop.f32.mrb[0].mxu0
          %v412 = vadd.f32 0.0, %v411
          %v413 = vpop.f32.mrb[0].mxu0
          %414 = vdwg.mxu0
          %416 = vset.pattern.permute.xlu0 0
          %417 = vperm.xlu0 %416, %v407
          %v418 = vpop.permute.xlu0 %417
          %421 = vset.pattern.permute.xlu0 0
          %422 = vperm.xlu0 %421, %v412
          %v423 = vpop.permute.xlu0 %422
          %v425 = vsub.f32 %v325, %v418
          %v426 = vsub.f32 %v326, %v423
          %v427 = vlaneseq
          %v428 = vand.u32 %v427, 127
          %vm429 = vcmp.lt.s32.totalorder %v428, 64
          %v430 = vsel %vm429, %v425, 0.0
          %v431 = vsel %vm429, %v426, 0.0
          %v432 = vmul.f32 %v430, %v430
          %v433 = vmul.f32 %v431, %v431
          %434 = vadd.xlane.f32.xlu0 %v432
          %v435 = vpop.xlane.xlu0 %434
          %436 = vadd.xlane.f32.xlu0 %v433
          %v437 = vpop.xlane.xlu0 %436
          %438 = vmatprep.subr.mxu0 0.0
          %439 = vmatpush1.msra.mxu0 %v435
          %440 = vmatprep.subr.mxu0 0.0
          %441 = vmatpush1.msra.mxu0 %v437
          %442 = vmatprep.subr.mxu0 0.0
          %443 = vmatpush1.msra.mxu0 0.0
          %444 = vmatprep.subr.mxu0 0.0
          %445 = vmatpush1.msra.mxu0 0.0
          %446 = vmatprep.subr.mxu0 0.0
          %447 = vmatpush1.msra.mxu0 0.0
          %448 = vmatprep.subr.mxu0 0.0
          %449 = vmatpush1.msra.mxu0 0.0
          %450 = vmatprep.subr.mxu0 0.0
          %451 = vmatpush1.msra.mxu0 0.0
          %452 = vmatprep.subr.mxu0 0.0
          %453 = vmatpush1.msra.mxu0 0.0
          %454 = vmatprep.subr.mxu0 0.0
          %455 = vmatpush1.msra.mxu0 0.0
          %456 = vmatprep.subr.mxu0 0.0
          %457 = vmatpush1.msra.mxu0 0.0
          %458 = vmatprep.subr.mxu0 0.0
          %459 = vmatpush1.msra.mxu0 0.0
          %460 = vmatprep.subr.mxu0 0.0
          %461 = vmatpush1.msra.mxu0 0.0
          %462 = vmatprep.subr.mxu0 0.0
          %463 = vmatpush1.msra.mxu0 0.0
          %464 = vmatprep.subr.mxu0 0.0
          %465 = vmatpush1.msra.mxu0 0.0
          %466 = vmatprep.subr.mxu0 0.0
          %467 = vmatpush1.msra.mxu0 0.0
          %468 = vmatprep.subr.mxu0 0.0
          %469 = vmatpush1.msra.mxu0 0.0
          %470 = vmatprep.subr.mxu0 0.0
          %471 = vmatpush1.msra.mxu0 0.0
          %472 = vmatprep.subr.mxu0 0.0
          %473 = vmatpush1.msra.mxu0 0.0
          %474 = vmatprep.subr.mxu0 0.0
          %475 = vmatpush1.msra.mxu0 0.0
          %476 = vmatprep.subr.mxu0 0.0
          %477 = vmatpush1.msra.mxu0 0.0
          %478 = vmatprep.subr.mxu0 0.0
          %479 = vmatpush1.msra.mxu0 0.0
          %480 = vmatprep.subr.mxu0 0.0
          %481 = vmatpush1.msra.mxu0 0.0
          %482 = vmatprep.subr.mxu0 0.0
          %483 = vmatpush1.msra.mxu0 0.0
          %484 = vmatprep.subr.mxu0 0.0
          %485 = vmatpush1.msra.mxu0 0.0
          %486 = vmatprep.subr.mxu0 0.0
          %487 = vmatpush1.msra.mxu0 0.0
          %488 = vmatprep.subr.mxu0 0.0
          %489 = vmatpush1.msra.mxu0 0.0
          %490 = vmatprep.subr.mxu0 0.0
          %491 = vmatpush1.msra.mxu0 0.0
          %492 = vmatprep.subr.mxu0 0.0
          %493 = vmatpush1.msra.mxu0 0.0
          %494 = vmatprep.subr.mxu0 0.0
          %495 = vmatpush1.msra.mxu0 0.0
          %496 = vmatprep.subr.mxu0 0.0
          %497 = vmatpush1.msra.mxu0 0.0
          %498 = vmatprep.subr.mxu0 0.0
          %499 = vmatpush1.msra.mxu0 0.0
          %500 = vmatprep.subr.mxu0 0.0
          %501 = vmatpush1.msra.mxu0 0.0
          %502 = vmatprep.mubr.f32.mxu0 0.0
          %503 = vmatmul.mubr.f32.gmra.mrb[0].mxu0 %v335
          %v504 = vpop.f32.mrb[0].mxu0
          %v505 = vadd.f32 1e-06, %v504
          %v506 = vpop.f32.mrb[0].mxu0
          %507 = vmatprep.mubr.f32.mxu0 0.0
          %508 = vmatmul.mubr.f32.gmra.mrb[0].mxu0 %v338
          %v509 = vpop.f32.mrb[0].mxu0
          %v510 = vadd.f32 1e-06, %v509
          %v511 = vpop.f32.mrb[0].mxu0
          %512 = vdwg.mxu0
          %v513 = vrsqrt.pop %v505
          %v514 = vrsqrt.pop %v510
          %516 = vset.pattern.permute.xlu0 0
          %517 = vperm.xlu0 %516, %v513
          %v518 = vpop.permute.xlu0 %517
          %521 = vset.pattern.permute.xlu0 0
          %522 = vperm.xlu0 %521, %v514
          %v523 = vpop.permute.xlu0 %522
          %v525 = vmul.f32 %v430, %v518
          %v526 = vmul.f32 %v431, %v523
          %v527 = vld [vmem:[%s2] sm:$0xff]
          %v528 = vld [vmem:[%s2 + $0x8] sm:$0xff]
          %530 = vset.pattern.permute.xlu0 0
          %531 = vperm.xlu0 %530, %v527
          %v532 = vpop.permute.xlu0 %531
          %535 = vset.pattern.permute.xlu0 0
          %536 = vperm.xlu0 %535, %v528
          %v537 = vpop.permute.xlu0 %536
          %v539 = vmul.f32 %v525, %v532
          %v540 = vmul.f32 %v526, %v537
          %v541 = vld [vmem:[%s3] sm:$0xff]
          %v542 = vld [vmem:[%s3 + $0x8] sm:$0xff]
          %544 = vset.pattern.permute.xlu0 0
          %545 = vperm.xlu0 %544, %v541
          %v546 = vpop.permute.xlu0 %545
          %549 = vset.pattern.permute.xlu0 0
          %550 = vperm.xlu0 %549, %v542
          %v551 = vpop.permute.xlu0 %550
          %v553 = vadd.f32 %v539, %v546
          %v554 = vadd.f32 %v540, %v551
          %555 = vst [vmem:[#allocation2] sm:$0xff] %v553
          %556 = vst [vmem:[#allocation2 + $0x8] sm:$0xff] %v554
          %v557 = vld [vmem:[%s4] sm:$0xff]
          %v558 = vld [vmem:[%s4 + $0x8] sm:$0xff]
          %v559 = vld [vmem:[%s4 + $0x10] sm:$0xff]
          %v560 = vld [vmem:[%s4 + $0x18] sm:$0xff]
          %v561 = vld [vmem:[%s4 + $0x20] sm:$0xff]
          %v562 = vld [vmem:[%s4 + $0x28] sm:$0xff]
          %v563 = vld [vmem:[%s5] sm:$0xff]
          %v564 = vld [vmem:[%s5 + $0x8] sm:$0xff]
          %v565 = vld [vmem:[%s5 + $0x10] sm:$0xff]
          %v566 = vld [vmem:[%s5 + $0x18] sm:$0xff]
          %v567 = vld [vmem:[%s5 + $0x20] sm:$0xff]
          %v568 = vld [vmem:[%s5 + $0x28] sm:$0xff]
          %570 = vset.pattern.permute.xlu0 0
          %571 = vperm.xlu0 %570, %v563
          %v572 = vpop.permute.xlu0 %571
          %575 = vset.pattern.permute.xlu0 0
          %576 = vperm.xlu0 %575, %v564
          %v577 = vpop.permute.xlu0 %576
          %580 = vset.pattern.permute.xlu0 0
          %581 = vperm.xlu0 %580, %v565
          %v582 = vpop.permute.xlu0 %581
          %585 = vset.pattern.permute.xlu0 0
          %586 = vperm.xlu0 %585, %v566
          %v587 = vpop.permute.xlu0 %586
          %590 = vset.pattern.permute.xlu0 0
          %591 = vperm.xlu0 %590, %v567
          %v592 = vpop.permute.xlu0 %591
          %595 = vset.pattern.permute.xlu0 0
          %596 = vperm.xlu0 %595, %v568
          %v597 = vpop.permute.xlu0 %596
          %v600 = vsel %vm333, %v557, 0
          %v603 = vsel %vm333, %v558, 0
          %v606 = vsel %vm333, %v559, 0
          %v609 = vsel %vm333, %v560, 0
          %v612 = vsel %vm333, %v561, 0
          %v615 = vsel %vm333, %v562, 0
          %617 = vmatprep.subr.mxu0 0.0
          %618 = vmatpush1.msra.mxu0 %v553
          %619 = vmatprep.subr.mxu0 0.0
          %620 = vmatpush1.msra.mxu0 %v554
          %621 = vmatprep.subr.mxu0 0.0
          %622 = vmatpush1.msra.mxu0 0.0
          %623 = vmatprep.subr.mxu0 0.0
          %624 = vmatpush1.msra.mxu0 0.0
          %625 = vmatprep.subr.mxu0 0.0
          %626 = vmatpush1.msra.mxu0 0.0
          %627 = vmatprep.subr.mxu0 0.0
          %628 = vmatpush1.msra.mxu0 0.0
          %629 = vmatprep.subr.mxu0 0.0
          %630 = vmatpush1.msra.mxu0 0.0
          %631 = vmatprep.subr.mxu0 0.0
          %632 = vmatpush1.msra.mxu0 0.0
          %633 = vmatprep.subr.mxu0 0.0
          %634 = vmatpush1.msra.mxu0 0.0
          %635 = vmatprep.subr.mxu0 0.0
          %636 = vmatpush1.msra.mxu0 0.0
          %637 = vmatprep.subr.mxu0 0.0
          %638 = vmatpush1.msra.mxu0 0.0
          %639 = vmatprep.subr.mxu0 0.0
          %640 = vmatpush1.msra.mxu0 0.0
          %641 = vmatprep.subr.mxu0 0.0
          %642 = vmatpush1.msra.mxu0 0.0
          %643 = vmatprep.subr.mxu0 0.0
          %644 = vmatpush1.msra.mxu0 0.0
          %645 = vmatprep.subr.mxu0 0.0
          %646 = vmatpush1.msra.mxu0 0.0
          %647 = vmatprep.subr.mxu0 0.0
          %648 = vmatpush1.msra.mxu0 0.0
          %649 = vmatprep.subr.mxu0 0.0
          %650 = vmatpush1.msra.mxu0 0.0
          %651 = vmatprep.subr.mxu0 0.0
          %652 = vmatpush1.msra.mxu0 0.0
          %653 = vmatprep.subr.mxu0 0.0
          %654 = vmatpush1.msra.mxu0 0.0
          %655 = vmatprep.subr.mxu0 0.0
          %656 = vmatpush1.msra.mxu0 0.0
          %657 = vmatprep.subr.mxu0 0.0
          %658 = vmatpush1.msra.mxu0 0.0
          %659 = vmatprep.subr.mxu0 0.0
          %660 = vmatpush1.msra.mxu0 0.0
          %661 = vmatprep.subr.mxu0 0.0
          %662 = vmatpush1.msra.mxu0 0.0
          %663 = vmatprep.subr.mxu0 0.0
          %664 = vmatpush1.msra.mxu0 0.0
          %665 = vmatprep.subr.mxu0 0.0
          %666 = vmatpush1.msra.mxu0 0.0
          %667 = vmatprep.subr.mxu0 0.0
          %668 = vmatpush1.msra.mxu0 0.0
          %669 = vmatprep.subr.mxu0 0.0
          %670 = vmatpush1.msra.mxu0 0.0
          %671 = vmatprep.subr.mxu0 0.0
          %672 = vmatpush1.msra.mxu0 0.0
          %673 = vmatprep.subr.mxu0 0.0
          %674 = vmatpush1.msra.mxu0 0.0
          %675 = vmatprep.subr.mxu0 0.0
          %676 = vmatpush1.msra.mxu0 0.0
          %677 = vmatprep.subr.mxu0 0.0
          %678 = vmatpush1.msra.mxu0 0.0
          %679 = vmatprep.subr.mxu0 0.0
          %680 = vmatpush1.msra.mxu0 0.0
          %681 = vmatprep.mubr.f32.mxu0 0.0
          %682 = vmatmul.mubr.f32.gmra.mrb[0].mxu0 %v600
          %v683 = vpop.f32.mrb[0].mxu0
          %v684 = vadd.f32 %v572, %v683
          %v685 = vpop.f32.mrb[0].mxu0
          %686 = vmatprep.mubr.f32.mxu0 0.0
          %687 = vmatmul.mubr.f32.gmra.mrb[0].mxu0 %v603
          %v688 = vpop.f32.mrb[0].mxu0
          %v689 = vadd.f32 %v577, %v688
          %v690 = vpop.f32.mrb[0].mxu0
          %691 = vmatprep.mubr.f32.mxu0 0.0
          %692 = vmatmul.mubr.f32.gmra.mrb[0].mxu0 %v606
          %v693 = vpop.f32.mrb[0].mxu0
          %v694 = vadd.f32 %v582, %v693
          %v695 = vpop.f32.mrb[0].mxu0
          %696 = vmatprep.mubr.f32.mxu0 0.0
          %697 = vmatmul.mubr.f32.gmra.mrb[0].mxu0 %v609
          %v698 = vpop.f32.mrb[0].mxu0
          %v699 = vadd.f32 %v587, %v698
          %v700 = vpop.f32.mrb[0].mxu0
          %701 = vmatprep.mubr.f32.mxu0 0.0
          %702 = vmatmul.mubr.f32.gmra.mrb[0].mxu0 %v612
          %v703 = vpop.f32.mrb[0].mxu0
          %v704 = vadd.f32 %v592, %v703
          %v705 = vpop.f32.mrb[0].mxu0
          %706 = vmatprep.mubr.f32.mxu0 0.0
          %707 = vmatmul.mubr.f32.gmra.mrb[0].mxu0 %v615
          %v708 = vpop.f32.mrb[0].mxu0
          %v709 = vadd.f32 %v597, %v708
          %v710 = vpop.f32.mrb[0].mxu0
          %711 = vdwg.mxu0
          %712 = vst [vmem:[#allocation3] sm:$0xff] %v684
          %713 = vst [vmem:[#allocation3 + $0x8] sm:$0xff] %v689
          %714 = vst [vmem:[#allocation4] sm:$0xff] %v694
          %715 = vst [vmem:[#allocation4 + $0x8] sm:$0xff] %v699
          %716 = vst [vmem:[#allocation5] sm:$0xff] %v704
          %717 = vst [vmem:[#allocation5 + $0x8] sm:$0xff] %v709
        $region52: #{tpu_custom_call.1} parent=47 // pred_fallthru
          _
        %s718 = smul.u32 %s27, 128
        %s719 = sshra.s32 %s718, 7
        %s720 = sand.u32 %s718, 127
        %s721 = scalar_lea.vmem [#allocation3], %s719
        %v722 = vld [vmem:[%s721] sm:$0xff]
        %v723 = vld [vmem:[%s721 + $0x8] sm:$0xff]
        %v724 = vld [vmem:[#allocation4] sm:$0xff]
        %v725 = vld [vmem:[#allocation4 + $0x8] sm:$0xff]
        %726 = vxpose.xlu0.b32.start [1/16] %v722, 128
        %727 = vxpose.xlu0.b32.cont [2/16] %v723, 128
        %728 = vxpose.xlu0.b32.cont [3/16] 0.0, 128
        %729 = vxpose.xlu0.b32.cont [4/16] 0.0, 128
        %730 = vxpose.xlu0.b32.cont [5/16] 0.0, 128
        %731 = vxpose.xlu0.b32.cont [6/16] 0.0, 128
        %732 = vxpose.xlu0.b32.cont [7/16] 0.0, 128
        %733 = vxpose.xlu0.b32.cont [8/16] 0.0, 128
        %734 = vxpose.xlu0.b32.cont [9/16] 0.0, 128
        %735 = vxpose.xlu0.b32.cont [10/16] 0.0, 128
        %736 = vxpose.xlu0.b32.cont [11/16] 0.0, 128
        %737 = vxpose.xlu0.b32.cont [12/16] 0.0, 128
        %738 = vxpose.xlu0.b32.cont [13/16] 0.0, 128
        %739 = vxpose.xlu0.b32.cont [14/16] 0.0, 128
        %740 = vxpose.xlu0.b32.cont [15/16] 0.0, 128
        %741 = vxpose.xlu0.b32.end [16/16] 0.0, 128
        %v742 = vpop.trf.xlu0
        %v743 = vpop.trf.xlu0
        %v744 = vpop.trf.xlu0
        %v745 = vpop.trf.xlu0
        %v746 = vpop.trf.xlu0
        %v747 = vpop.trf.xlu0
        %v748 = vpop.trf.xlu0
        %v749 = vpop.trf.xlu0
        %v750 = vpop.trf.xlu0
        %v751 = vpop.trf.xlu0
        %v752 = vpop.trf.xlu0
        %v753 = vpop.trf.xlu0
        %v754 = vpop.trf.xlu0
        %v755 = vpop.trf.xlu0
        %v756 = vpop.trf.xlu0
        %v757 = vpop.trf.xlu0
        %vm758 = vcmask 130048
        %v760 = vsel %vm758, %v742, 0
        %v763 = vsel %vm758, %v743, 0
        %v766 = vsel %vm758, %v744, 0
        %v769 = vsel %vm758, %v745, 0
        %v772 = vsel %vm758, %v746, 0
        %v775 = vsel %vm758, %v747, 0
        %v778 = vsel %vm758, %v748, 0
        %v781 = vsel %vm758, %v749, 0
        %v784 = vsel %vm758, %v750, 0
        %v787 = vsel %vm758, %v751, 0
        %v790 = vsel %vm758, %v752, 0
        %v793 = vsel %vm758, %v753, 0
        %v796 = vsel %vm758, %v754, 0
        %v799 = vsel %vm758, %v755, 0
        %v802 = vsel %vm758, %v756, 0
        %v805 = vsel %vm758, %v757, 0
        %807 = vmatprep.subr.mxu0 0.0
        %808 = vmatpush1.msra.mxu0 %v724
        %809 = vmatprep.subr.mxu0 0.0
        %810 = vmatpush1.msra.mxu0 %v725
        %811 = vmatprep.subr.mxu0 0.0
        %812 = vmatpush1.msra.mxu0 0.0
        %813 = vmatprep.subr.mxu0 0.0
        %814 = vmatpush1.msra.mxu0 0.0
        %815 = vmatprep.subr.mxu0 0.0
        %816 = vmatpush1.msra.mxu0 0.0
        %817 = vmatprep.subr.mxu0 0.0
        %818 = vmatpush1.msra.mxu0 0.0
        %819 = vmatprep.subr.mxu0 0.0
        %820 = vmatpush1.msra.mxu0 0.0
        %821 = vmatprep.subr.mxu0 0.0
        %822 = vmatpush1.msra.mxu0 0.0
        %823 = vmatprep.subr.mxu0 0.0
        %824 = vmatpush1.msra.mxu0 0.0
        %825 = vmatprep.subr.mxu0 0.0
        %826 = vmatpush1.msra.mxu0 0.0
        %827 = vmatprep.subr.mxu0 0.0
        %828 = vmatpush1.msra.mxu0 0.0
        %829 = vmatprep.subr.mxu0 0.0
        %830 = vmatpush1.msra.mxu0 0.0
        %831 = vmatprep.subr.mxu0 0.0
        %832 = vmatpush1.msra.mxu0 0.0
        %833 = vmatprep.subr.mxu0 0.0
        %834 = vmatpush1.msra.mxu0 0.0
        %835 = vmatprep.subr.mxu0 0.0
        %836 = vmatpush1.msra.mxu0 0.0
        %837 = vmatprep.subr.mxu0 0.0
        %838 = vmatpush1.msra.mxu0 0.0
        %839 = vmatprep.subr.mxu0 0.0
        %840 = vmatpush1.msra.mxu0 0.0
        %841 = vmatprep.subr.mxu0 0.0
        %842 = vmatpush1.msra.mxu0 0.0
        %843 = vmatprep.subr.mxu0 0.0
        %844 = vmatpush1.msra.mxu0 0.0
        %845 = vmatprep.subr.mxu0 0.0
        %846 = vmatpush1.msra.mxu0 0.0
        %847 = vmatprep.subr.mxu0 0.0
        %848 = vmatpush1.msra.mxu0 0.0
        %849 = vmatprep.subr.mxu0 0.0
        %850 = vmatpush1.msra.mxu0 0.0
        %851 = vmatprep.subr.mxu0 0.0
        %852 = vmatpush1.msra.mxu0 0.0
        %853 = vmatprep.subr.mxu0 0.0
        %854 = vmatpush1.msra.mxu0 0.0
        %855 = vmatprep.subr.mxu0 0.0
        %856 = vmatpush1.msra.mxu0 0.0
        %857 = vmatprep.subr.mxu0 0.0
        %858 = vmatpush1.msra.mxu0 0.0
        %859 = vmatprep.subr.mxu0 0.0
        %860 = vmatpush1.msra.mxu0 0.0
        %861 = vmatprep.subr.mxu0 0.0
        %862 = vmatpush1.msra.mxu0 0.0
        %863 = vmatprep.subr.mxu0 0.0
        %864 = vmatpush1.msra.mxu0 0.0
        %865 = vmatprep.subr.mxu0 0.0
        %866 = vmatpush1.msra.mxu0 0.0
        %867 = vmatprep.subr.mxu0 0.0
        %868 = vmatpush1.msra.mxu0 0.0
        %869 = vmatprep.subr.mxu0 0.0
        %870 = vmatpush1.msra.mxu0 0.0
        %871 = vmatprep.mubr.f32.mxu0 0.0
        %872 = vmatmul.mubr.f32.gmra.mrb[0].mxu0 %v760
        %v873 = vpop.f32.mrb[0].mxu0
        %v874 = vadd.f32 0.0, %v873
        %v875 = vpop.f32.mrb[0].mxu0
        %876 = vmatprep.mubr.f32.mxu0 0.0
        %877 = vmatmul.mubr.f32.gmra.mrb[0].mxu0 %v763
        %v878 = vpop.f32.mrb[0].mxu0
        %v879 = vadd.f32 0.0, %v878
        %v880 = vpop.f32.mrb[0].mxu0
        %881 = vmatprep.mubr.f32.mxu0 0.0
        %882 = vmatmul.mubr.f32.gmra.mrb[0].mxu0 %v766
        %v883 = vpop.f32.mrb[0].mxu0
        %v884 = vadd.f32 0.0, %v883
        %v885 = vpop.f32.mrb[0].mxu0
        %886 = vmatprep.mubr.f32.mxu0 0.0
        %887 = vmatmul.mubr.f32.gmra.mrb[0].mxu0 %v769
        %v888 = vpop.f32.mrb[0].mxu0
        %v889 = vadd.f32 0.0, %v888
        %v890 = vpop.f32.mrb[0].mxu0
        %891 = vmatprep.mubr.f32.mxu0 0.0
        %892 = vmatmul.mubr.f32.gmra.mrb[0].mxu0 %v772
        %v893 = vpop.f32.mrb[0].mxu0
        %v894 = vadd.f32 0.0, %v893
        %v895 = vpop.f32.mrb[0].mxu0
        %896 = vmatprep.mubr.f32.mxu0 0.0
        %897 = vmatmul.mubr.f32.gmra.mrb[0].mxu0 %v775
        %v898 = vpop.f32.mrb[0].mxu0
        %v899 = vadd.f32 0.0, %v898
        %v900 = vpop.f32.mrb[0].mxu0
        %901 = vmatprep.mubr.f32.mxu0 0.0
        %902 = vmatmul.mubr.f32.gmra.mrb[0].mxu0 %v778
        %v903 = vpop.f32.mrb[0].mxu0
        %v904 = vadd.f32 0.0, %v903
        %v905 = vpop.f32.mrb[0].mxu0
        %906 = vmatprep.mubr.f32.mxu0 0.0
        %907 = vmatmul.mubr.f32.gmra.mrb[0].mxu0 %v781
        %v908 = vpop.f32.mrb[0].mxu0
        %v909 = vadd.f32 0.0, %v908
        %v910 = vpop.f32.mrb[0].mxu0
        %911 = vmatprep.mubr.f32.mxu0 0.0
        %912 = vmatmul.mubr.f32.gmra.mrb[0].mxu0 %v784
        %v913 = vpop.f32.mrb[0].mxu0
        %v914 = vadd.f32 0.0, %v913
        %v915 = vpop.f32.mrb[0].mxu0
        %916 = vmatprep.mubr.f32.mxu0 0.0
        %917 = vmatmul.mubr.f32.gmra.mrb[0].mxu0 %v787
        %v918 = vpop.f32.mrb[0].mxu0
        %v919 = vadd.f32 0.0, %v918
        %v920 = vpop.f32.mrb[0].mxu0
        %921 = vmatprep.mubr.f32.mxu0 0.0
        %922 = vmatmul.mubr.f32.gmra.mrb[0].mxu0 %v790
        %v923 = vpop.f32.mrb[0].mxu0
        %v924 = vadd.f32 0.0, %v923
        %v925 = vpop.f32.mrb[0].mxu0
        %926 = vmatprep.mubr.f32.mxu0 0.0
        %927 = vmatmul.mubr.f32.gmra.mrb[0].mxu0 %v793
        %v928 = vpop.f32.mrb[0].mxu0
        %v929 = vadd.f32 0.0, %v928
        %v930 = vpop.f32.mrb[0].mxu0
        %931 = vmatprep.mubr.f32.mxu0 0.0
        %932 = vmatmul.mubr.f32.gmra.mrb[0].mxu0 %v796
        %v933 = vpop.f32.mrb[0].mxu0
        %v934 = vadd.f32 0.0, %v933
        %v935 = vpop.f32.mrb[0].mxu0
        %936 = vmatprep.mubr.f32.mxu0 0.0
        %937 = vmatmul.mubr.f32.gmra.mrb[0].mxu0 %v799
        %v938 = vpop.f32.mrb[0].mxu0
        %v939 = vadd.f32 0.0, %v938
        %v940 = vpop.f32.mrb[0].mxu0
        %941 = vmatprep.mubr.f32.mxu0 0.0
        %942 = vmatmul.mubr.f32.gmra.mrb[0].mxu0 %v802
        %v943 = vpop.f32.mrb[0].mxu0
        %v944 = vadd.f32 0.0, %v943
        %v945 = vpop.f32.mrb[0].mxu0
        %946 = vmatprep.mubr.f32.mxu0 0.0
        %947 = vmatmul.mubr.f32.gmra.mrb[0].mxu0 %v805
        %v948 = vpop.f32.mrb[0].mxu0
        %v949 = vadd.f32 0.0, %v948
        %v950 = vpop.f32.mrb[0].mxu0
        %951 = vdwg.mxu0
        %v952 = vlaneseq
        %v953 = vand.u32 %v952, 127
        %vm954 = vcmp.lt.s32.totalorder %v953, 64
        %v955 = vsel %vm954, %v874, -1e+30
        %v956 = vsel %vm954, %v879, -1e+30
        %v957 = vsel %vm954, %v884, -1e+30
        %v958 = vsel %vm954, %v889, -1e+30
        %v959 = vsel %vm954, %v894, -1e+30
        %v960 = vsel %vm954, %v899, -1e+30
        %v961 = vsel %vm954, %v904, -1e+30
        %v962 = vsel %vm954, %v909, -1e+30
        %v963 = vsel %vm954, %v914, -1e+30
        %v964 = vsel %vm954, %v919, -1e+30
        %v965 = vsel %vm954, %v924, -1e+30
        %v966 = vsel %vm954, %v929, -1e+30
        %v967 = vsel %vm954, %v934, -1e+30
        %v968 = vsel %vm954, %v939, -1e+30
        %v969 = vsel %vm954, %v944, -1e+30
        %v970 = vsel %vm954, %v949, -1e+30
        %971 = vmax.xlane.f32.xlu0 %v955
        %v972 = vpop.xlane.xlu0 %971
        %973 = vmax.xlane.f32.xlu0 %v956
        %v974 = vpop.xlane.xlu0 %973
        %975 = vmax.xlane.f32.xlu0 %v957
        %v976 = vpop.xlane.xlu0 %975
        %977 = vmax.xlane.f32.xlu0 %v958
        %v978 = vpop.xlane.xlu0 %977
        %979 = vmax.xlane.f32.xlu0 %v959
        %v980 = vpop.xlane.xlu0 %979
        %981 = vmax.xlane.f32.xlu0 %v960
        %v982 = vpop.xlane.xlu0 %981
        %983 = vmax.xlane.f32.xlu0 %v961
        %v984 = vpop.xlane.xlu0 %983
        %985 = vmax.xlane.f32.xlu0 %v962
        %v986 = vpop.xlane.xlu0 %985
        %987 = vmax.xlane.f32.xlu0 %v963
        %v988 = vpop.xlane.xlu0 %987
        %989 = vmax.xlane.f32.xlu0 %v964
        %v990 = vpop.xlane.xlu0 %989
        %991 = vmax.xlane.f32.xlu0 %v965
        %v992 = vpop.xlane.xlu0 %991
        %993 = vmax.xlane.f32.xlu0 %v966
        %v994 = vpop.xlane.xlu0 %993
        %995 = vmax.xlane.f32.xlu0 %v967
        %v996 = vpop.xlane.xlu0 %995
        %997 = vmax.xlane.f32.xlu0 %v968
        %v998 = vpop.xlane.xlu0 %997
        %999 = vmax.xlane.f32.xlu0 %v969
        %v1000 = vpop.xlane.xlu0 %999
        %1001 = vmax.xlane.f32.xlu0 %v970
        %v1002 = vpop.xlane.xlu0 %1001
        %v1003 = vsub.f32 %v955, %v972
        %v1004 = vsub.f32 %v956, %v974
        %v1005 = vsub.f32 %v957, %v976
        %v1006 = vsub.f32 %v958, %v978
        %v1007 = vsub.f32 %v959, %v980
        %v1008 = vsub.f32 %v960, %v982
        %v1009 = vsub.f32 %v961, %v984
        %v1010 = vsub.f32 %v962, %v986
        %v1011 = vsub.f32 %v963, %v988
        %v1012 = vsub.f32 %v964, %v990
        %v1013 = vsub.f32 %v965, %v992
        %v1014 = vsub.f32 %v966, %v994
        %v1015 = vsub.f32 %v967, %v996
        %v1016 = vsub.f32 %v968, %v998
        %v1017 = vsub.f32 %v969, %v1000
        %v1018 = vsub.f32 %v970, %v1002
        %v1019 = vmul.f32 %v1003, 1.442695
        %v1020 = vpow.pop %v1019
        %v1021 = vmul.f32 %v1004, 1.442695
        %v1022 = vpow.pop %v1021
        %v1023 = vmul.f32 %v1005, 1.442695
        %v1024 = vpow.pop %v1023
        %v1025 = vmul.f32 %v1006, 1.442695
        %v1026 = vpow.pop %v1025
        %v1027 = vmul.f32 %v1007, 1.442695
        %v1028 = vpow.pop %v1027
        %v1029 = vmul.f32 %v1008, 1.442695
        %v1030 = vpow.pop %v1029
        %v1031 = vmul.f32 %v1009, 1.442695
        %v1032 = vpow.pop %v1031
        %v1033 = vmul.f32 %v1010, 1.442695
        %v1034 = vpow.pop %v1033
        %v1035 = vmul.f32 %v1011, 1.442695
        %v1036 = vpow.pop %v1035
        %v1037 = vmul.f32 %v1012, 1.442695
        %v1038 = vpow.pop %v1037
        %v1039 = vmul.f32 %v1013, 1.442695
        %v1040 = vpow.pop %v1039
        %v1041 = vmul.f32 %v1014, 1.442695
        %v1042 = vpow.pop %v1041
        %v1043 = vmul.f32 %v1015, 1.442695
        %v1044 = vpow.pop %v1043
        %v1045 = vmul.f32 %v1016, 1.442695
        %v1046 = vpow.pop %v1045
        %v1047 = vmul.f32 %v1017, 1.442695
        %v1048 = vpow.pop %v1047
        %v1049 = vmul.f32 %v1018, 1.442695
        %v1050 = vpow.pop %v1049
        %1051 = vmatprep.subr.mxu0 0.0
        %1052 = vmatpush1.xpose.msra.mxu0 %v1020
        %1053 = vmatprep.subr.mxu0 0.0
        %1054 = vmatpush1.xpose.msra.mxu0 %v1022
        %1055 = vmatprep.subr.mxu0 0.0
        %1056 = vmatpush1.xpose.msra.mxu0 %v1024
        %1057 = vmatprep.subr.mxu0 0.0
        %1058 = vmatpush1.xpose.msra.mxu0 %v1026
        %1059 = vmatprep.subr.mxu0 0.0
        %1060 = vmatpush1.xpose.msra.mxu0 %v1028
        %1061 = vmatprep.subr.mxu0 0.0
        %1062 = vmatpush1.xpose.msra.mxu0 %v1030
        %1063 = vmatprep.subr.mxu0 0.0
        %1064 = vmatpush1.xpose.msra.mxu0 %v1032
        %1065 = vmatprep.subr.mxu0 0.0
        %1066 = vmatpush1.xpose.msra.mxu0 %v1034
        %1067 = vmatprep.subr.mxu0 0.0
        %1068 = vmatpush1.xpose.msra.mxu0 %v1036
        %1069 = vmatprep.subr.mxu0 0.0
        %1070 = vmatpush1.xpose.msra.mxu0 %v1038
        %1071 = vmatprep.subr.mxu0 0.0
        %1072 = vmatpush1.xpose.msra.mxu0 %v1040
        %1073 = vmatprep.subr.mxu0 0.0
        %1074 = vmatpush1.xpose.msra.mxu0 %v1042
        %1075 = vmatprep.subr.mxu0 0.0
        %1076 = vmatpush1.xpose.msra.mxu0 %v1044
        %1077 = vmatprep.subr.mxu0 0.0
        %1078 = vmatpush1.xpose.msra.mxu0 %v1046
        %1079 = vmatprep.subr.mxu0 0.0
        %1080 = vmatpush1.xpose.msra.mxu0 %v1048
        %1081 = vmatprep.subr.mxu0 0.0
        %1082 = vmatpush1.xpose.msra.mxu0 %v1050
        %1083 = vmatprep.subr.mxu0 0.0
        %1084 = vmatpush1.xpose.msra.mxu0 0.0
        %1085 = vmatprep.subr.mxu0 0.0
        %1086 = vmatpush1.xpose.msra.mxu0 0.0
        %1087 = vmatprep.subr.mxu0 0.0
        %1088 = vmatpush1.xpose.msra.mxu0 0.0
        %1089 = vmatprep.subr.mxu0 0.0
        %1090 = vmatpush1.xpose.msra.mxu0 0.0
        %1091 = vmatprep.subr.mxu0 0.0
        %1092 = vmatpush1.xpose.msra.mxu0 0.0
        %1093 = vmatprep.subr.mxu0 0.0
        %1094 = vmatpush1.xpose.msra.mxu0 0.0
        %1095 = vmatprep.subr.mxu0 0.0
        %1096 = vmatpush1.xpose.msra.mxu0 0.0
        %1097 = vmatprep.subr.mxu0 0.0
        %1098 = vmatpush1.xpose.msra.mxu0 0.0
        %1099 = vmatprep.subr.mxu0 0.0
        %1100 = vmatpush1.xpose.msra.mxu0 0.0
        %1101 = vmatprep.subr.mxu0 0.0
        %1102 = vmatpush1.xpose.msra.mxu0 0.0
        %1103 = vmatprep.subr.mxu0 0.0
        %1104 = vmatpush1.xpose.msra.mxu0 0.0
        %1105 = vmatprep.subr.mxu0 0.0
        %1106 = vmatpush1.xpose.msra.mxu0 0.0
        %1107 = vmatprep.subr.mxu0 0.0
        %1108 = vmatpush1.xpose.msra.mxu0 0.0
        %1109 = vmatprep.subr.mxu0 0.0
        %1110 = vmatpush1.xpose.msra.mxu0 0.0
        %1111 = vmatprep.subr.mxu0 0.0
        %1112 = vmatpush1.xpose.msra.mxu0 0.0
        %1113 = vmatprep.subr.mxu0 0.0
        %1114 = vmatpush1.xpose.msra.mxu0 0.0
        %1115 = vmatprep.mubr.f32.mxu0 0.0
        %1116 = vmatmul.mubr.f32.gmra.mrb[0].mxu0 1.0
        %v1117 = vpop.f32.mrb[0].mxu0
        %v1118 = vadd.f32 0.0, %v1117
        %v1119 = vpop.f32.mrb[0].mxu0
        %1120 = vdwg.mxu0
        %v1121 = vld [vmem:[#allocation5] sm:$0xff]
        %v1122 = vld [vmem:[#allocation5 + $0x8] sm:$0xff]
        %1123 = vmatprep.subr.mxu0 0.0
        %1124 = vmatpush1.xpose.msra.mxu0 %v1020
        %1125 = vmatprep.subr.mxu0 0.0
        %1126 = vmatpush1.xpose.msra.mxu0 %v1022
        %1127 = vmatprep.subr.mxu0 0.0
        %1128 = vmatpush1.xpose.msra.mxu0 %v1024
        %1129 = vmatprep.subr.mxu0 0.0
        %1130 = vmatpush1.xpose.msra.mxu0 %v1026
        %1131 = vmatprep.subr.mxu0 0.0
        %1132 = vmatpush1.xpose.msra.mxu0 %v1028
        %1133 = vmatprep.subr.mxu0 0.0
        %1134 = vmatpush1.xpose.msra.mxu0 %v1030
        %1135 = vmatprep.subr.mxu0 0.0
        %1136 = vmatpush1.xpose.msra.mxu0 %v1032
        %1137 = vmatprep.subr.mxu0 0.0
        %1138 = vmatpush1.xpose.msra.mxu0 %v1034
        %1139 = vmatprep.subr.mxu0 0.0
        %1140 = vmatpush1.xpose.msra.mxu0 %v1036
        %1141 = vmatprep.subr.mxu0 0.0
        %1142 = vmatpush1.xpose.msra.mxu0 %v1038
        %1143 = vmatprep.subr.mxu0 0.0
        %1144 = vmatpush1.xpose.msra.mxu0 %v1040
        %1145 = vmatprep.subr.mxu0 0.0
        %1146 = vmatpush1.xpose.msra.mxu0 %v1042
        %1147 = vmatprep.subr.mxu0 0.0
        %1148 = vmatpush1.xpose.msra.mxu0 %v1044
        %1149 = vmatprep.subr.mxu0 0.0
        %1150 = vmatpush1.xpose.msra.mxu0 %v1046
        %1151 = vmatprep.subr.mxu0 0.0
        %1152 = vmatpush1.xpose.msra.mxu0 %v1048
        %1153 = vmatprep.subr.mxu0 0.0
        %1154 = vmatpush1.xpose.msra.mxu0 %v1050
        %1155 = vmatprep.subr.mxu0 0.0
        %1156 = vmatpush1.xpose.msra.mxu0 0.0
        %1157 = vmatprep.subr.mxu0 0.0
        %1158 = vmatpush1.xpose.msra.mxu0 0.0
        %1159 = vmatprep.subr.mxu0 0.0
        %1160 = vmatpush1.xpose.msra.mxu0 0.0
        %1161 = vmatprep.subr.mxu0 0.0
        %1162 = vmatpush1.xpose.msra.mxu0 0.0
        %1163 = vmatprep.subr.mxu0 0.0
        %1164 = vmatpush1.xpose.msra.mxu0 0.0
        %1165 = vmatprep.subr.mxu0 0.0
        %1166 = vmatpush1.xpose.msra.mxu0 0.0
        %1167 = vmatprep.subr.mxu0 0.0
        %1168 = vmatpush1.xpose.msra.mxu0 0.0
        %1169 = vmatprep.subr.mxu0 0.0
        %1170 = vmatpush1.xpose.msra.mxu0 0.0
        %1171 = vmatprep.subr.mxu0 0.0
        %1172 = vmatpush1.xpose.msra.mxu0 0.0
        %1173 = vmatprep.subr.mxu0 0.0
        %1174 = vmatpush1.xpose.msra.mxu0 0.0
        %1175 = vmatprep.subr.mxu0 0.0
        %1176 = vmatpush1.xpose.msra.mxu0 0.0
        %1177 = vmatprep.subr.mxu0 0.0
        %1178 = vmatpush1.xpose.msra.mxu0 0.0
        %1179 = vmatprep.subr.mxu0 0.0
        %1180 = vmatpush1.xpose.msra.mxu0 0.0
        %1181 = vmatprep.subr.mxu0 0.0
        %1182 = vmatpush1.xpose.msra.mxu0 0.0
        %1183 = vmatprep.subr.mxu0 0.0
        %1184 = vmatpush1.xpose.msra.mxu0 0.0
        %1185 = vmatprep.subr.mxu0 0.0
        %1186 = vmatpush1.xpose.msra.mxu0 0.0
        %1187 = vmatprep.mubr.f32.mxu0 0.0
        %1188 = vmatmul.mubr.f32.gmra.mrb[0].mxu0 %v1121
        %v1189 = vpop.f32.mrb[0].mxu0
        %v1190 = vadd.f32 0.0, %v1189
        %v1191 = vpop.f32.mrb[0].mxu0
        %1192 = vmatprep.mubr.f32.mxu0 0.0
        %1193 = vmatmul.mubr.f32.gmra.mrb[0].mxu0 %v1122
        %v1194 = vpop.f32.mrb[0].mxu0
        %v1195 = vadd.f32 0.0, %v1194
        %v1196 = vpop.f32.mrb[0].mxu0
        %1197 = vdwg.mxu0
        %v1198 = vrcp.pop %v1118
        %v1199 = vmul.f32 1.0, %v1198
        %v1200 = vlaneseq
        %v1201 = vshrl.u32 %v1200, 7
        %v1202 = vsub.s32 0, %v1201
        %v1203 = vrot.slane %v1199, %v1202
        %v1204 = vmul.f32 %v1190, %v1203
        %v1205 = vmul.f32 %v1195, %v1203
        %v1206 = vld [vmem:[%s6] sm:$0xff]
        %v1207 = vld [vmem:[%s6 + $0x8] sm:$0xff]
        %v1208 = vld [vmem:[%s7] sm:$0xff]
        %v1209 = vld [vmem:[%s7 + $0x8] sm:$0xff]
        %1211 = vset.pattern.permute.xlu0 0
        %1212 = vperm.xlu0 %1211, %v1208
        %v1213 = vpop.permute.xlu0 %1212
        %1216 = vset.pattern.permute.xlu0 0
        %1217 = vperm.xlu0 %1216, %v1209
        %v1218 = vpop.permute.xlu0 %1217
        %v1221 = vsel %vm758, %v1206, 0
        %v1224 = vsel %vm758, %v1207, 0
        %1226 = vmatprep.subr.mxu0 0.0
        %1227 = vmatpush1.msra.mxu0 %v1204
        %1228 = vmatprep.subr.mxu0 0.0
        %1229 = vmatpush1.msra.mxu0 %v1205
        %1230 = vmatprep.subr.mxu0 0.0
        %1231 = vmatpush1.msra.mxu0 0.0
        %1232 = vmatprep.subr.mxu0 0.0
        %1233 = vmatpush1.msra.mxu0 0.0
        %1234 = vmatprep.subr.mxu0 0.0
        %1235 = vmatpush1.msra.mxu0 0.0
        %1236 = vmatprep.subr.mxu0 0.0
        %1237 = vmatpush1.msra.mxu0 0.0
        %1238 = vmatprep.subr.mxu0 0.0
        %1239 = vmatpush1.msra.mxu0 0.0
        %1240 = vmatprep.subr.mxu0 0.0
        %1241 = vmatpush1.msra.mxu0 0.0
        %1242 = vmatprep.subr.mxu0 0.0
        %1243 = vmatpush1.msra.mxu0 0.0
        %1244 = vmatprep.subr.mxu0 0.0
        %1245 = vmatpush1.msra.mxu0 0.0
        %1246 = vmatprep.subr.mxu0 0.0
        %1247 = vmatpush1.msra.mxu0 0.0
        %1248 = vmatprep.subr.mxu0 0.0
        %1249 = vmatpush1.msra.mxu0 0.0
        %1250 = vmatprep.subr.mxu0 0.0
        %1251 = vmatpush1.msra.mxu0 0.0
        %1252 = vmatprep.subr.mxu0 0.0
        %1253 = vmatpush1.msra.mxu0 0.0
        %1254 = vmatprep.subr.mxu0 0.0
        %1255 = vmatpush1.msra.mxu0 0.0
        %1256 = vmatprep.subr.mxu0 0.0
        %1257 = vmatpush1.msra.mxu0 0.0
        %1258 = vmatprep.subr.mxu0 0.0
        %1259 = vmatpush1.msra.mxu0 0.0
        %1260 = vmatprep.subr.mxu0 0.0
        %1261 = vmatpush1.msra.mxu0 0.0
        %1262 = vmatprep.subr.mxu0 0.0
        %1263 = vmatpush1.msra.mxu0 0.0
        %1264 = vmatprep.subr.mxu0 0.0
        %1265 = vmatpush1.msra.mxu0 0.0
        %1266 = vmatprep.subr.mxu0 0.0
        %1267 = vmatpush1.msra.mxu0 0.0
        %1268 = vmatprep.subr.mxu0 0.0
        %1269 = vmatpush1.msra.mxu0 0.0
        %1270 = vmatprep.subr.mxu0 0.0
        %1271 = vmatpush1.msra.mxu0 0.0
        %1272 = vmatprep.subr.mxu0 0.0
        %1273 = vmatpush1.msra.mxu0 0.0
        %1274 = vmatprep.subr.mxu0 0.0
        %1275 = vmatpush1.msra.mxu0 0.0
        %1276 = vmatprep.subr.mxu0 0.0
        %1277 = vmatpush1.msra.mxu0 0.0
        %1278 = vmatprep.subr.mxu0 0.0
        %1279 = vmatpush1.msra.mxu0 0.0
        %1280 = vmatprep.subr.mxu0 0.0
        %1281 = vmatpush1.msra.mxu0 0.0
        %1282 = vmatprep.subr.mxu0 0.0
        %1283 = vmatpush1.msra.mxu0 0.0
        %1284 = vmatprep.subr.mxu0 0.0
        %1285 = vmatpush1.msra.mxu0 0.0
        %1286 = vmatprep.subr.mxu0 0.0
        %1287 = vmatpush1.msra.mxu0 0.0
        %1288 = vmatprep.subr.mxu0 0.0
        %1289 = vmatpush1.msra.mxu0 0.0
        %1290 = vmatprep.mubr.f32.mxu0 0.0
        %1291 = vmatmul.mubr.f32.gmra.mrb[0].mxu0 %v1221
        %v1292 = vpop.f32.mrb[0].mxu0
        %v1293 = vadd.f32 %v1213, %v1292
        %v1294 = vpop.f32.mrb[0].mxu0
        %1295 = vmatprep.mubr.f32.mxu0 0.0
        %1296 = vmatmul.mubr.f32.gmra.mrb[0].mxu0 %v1224
        %v1297 = vpop.f32.mrb[0].mxu0
        %v1298 = vadd.f32 %v1218, %v1297
        %v1299 = vpop.f32.mrb[0].mxu0
        %1300 = vdwg.mxu0
        %s1301 = scalar_lea.vmem [#allocation2], %s719
        %v1302 = vld [vmem:[%s1301] sm:$0xff]
        %v1303 = vld [vmem:[%s1301 + $0x8] sm:$0xff]
        %v1304 = vadd.f32 %v1302, %v1293
        %v1305 = vadd.f32 %v1303, %v1298
        %1306 = vst [vmem:[%s271] sm:$0xff] %v1304
        %1307 = vst [vmem:[%s271 + $0x8] sm:$0xff] %v1305
        %s1308 = sand.u32 %s191, 1
        %s1309 = scalar_lea.sflag [#allocation8], %s1308
        %s1310 = sand.u32 %s191, 1
        %s1311 = smul.addr %s1310, 16
        %s1312 = scalar_lea.vmem [#allocation7], %s1311
        // Predicated region
        $region87: #{tpu_custom_call.1} parent=47 // pred_check
          %p1313 = pneg %p201
        $region88: #{tpu_custom_call.1} parent=47 // pred_check_branch
          %1315 = sbr.rel (%p1313) target = $region90
        $region89: #{tpu_custom_call.1} parent=47 // pred_region
          %s1317 = ssub.s32 256, 256
          %1318 = vsyncadd %s1309, %s1317
          %s1319 = smul.addr %s26, 2
          %s1320 = sadd.s32 %s27, %s1319
          %s1321 = smul.addr %s1320, 128
          %s1322 = scalar_lea.hbm %s8, %s1321
          %s1323 = sshll.u32 %s1312, 4
          %s1324 = int_to_ptr.vmem [resolvable:$true] %s1323
          %1329 = dma.vmem_to_hbm [thread:$0]  %s1324, 256, %s1322, %s1309, 128, 128, 8
        $region90: #{tpu_custom_call.1} parent=47 // pred_fallthru
          _
      $region48: #{tpu_custom_call.1} parent=5 // pred_fallthru
        _
      %p1330 = scmp.le.s32.totalorder 2, %s17
      // Predicated region
      $region91: #{tpu_custom_call.1} parent=5 // pred_check
        %p1331 = pneg %p1330
      $region92: #{tpu_custom_call.1} parent=5 // pred_check_branch
        %1333 = sbr.rel (%p1331) target = $region94
      $region93: #{tpu_custom_call.1} parent=5 // pred_region
        %s1334 = ssub.s32 %s17, 2
        // Predicated region
        $region95: #{tpu_custom_call.1} parent=93 // pred_check
          %p1335 = pneg %p207
        $region96: #{tpu_custom_call.1} parent=93 // pred_check_branch
          %1337 = sbr.rel (%p1335) target = $region98
        $region97: #{tpu_custom_call.1} parent=93 // pred_region
          %s1338 = sand.u32 %s192, 1
          %s1339 = scalar_lea.sflag [#allocation8], %s1338
          %s1340 = sand.u32 %s192, 1
          %s1341 = smul.addr %s1340, 16
          %s1342 = scalar_lea.vmem [#allocation7], %s1341
          %1343 = dma.done %s1339, 256
        $region98: #{tpu_custom_call.1} parent=93 // pred_fallthru
          _
      $region94: #{tpu_custom_call.1} parent=5 // pred_fallthru
        _
    $region6: #{tpu_custom_call.1} parent=1 // loop_footer
      %s21 = sadd.s32 1, %s17
    $region7: #{tpu_custom_call.1} parent=1 // loop_footer_branch
      %16 = sbr.rel target = $region3
    $region8: #{tpu_custom_call.1} parent=1 // loop_exit
      _
    %1344 = vsyncpa [#allocation8], 1
    %s1345 = scalar_lea.sflag [#allocation8], 1
    %1346 = vsyncpa %s1345, 1
  %1347 = vsyncmov [#allocation6]
  %s1348 = vpop.sfrf %1347
  %p1349 = scmp.eq.s32.totalorder %s1348, 0
  %p1350 = pneg %p1349
  %1352 = shalt.err (%p1350)

</llo_original>
